<compile_context>
chip_gen: v5e
topology: v5e:2x2
jax: 0.10.0
libtpu: 0.0.40
codegen_flags: <defaults>
</compile_context>

<pallas_src>
import jax
import jax.numpy as jnp
from jax import lax
from jax.experimental import pallas as pl
from jax.experimental.pallas import tpu as pltpu


# ----------------------------- in-kernel helpers -----------------------------

def _sigmoid(x):
    return 1.0 / (1.0 + jnp.exp(-x))


# --------------------------------- the kernel --------------------------------

def spade_kernel(f_ref,                       # (1, H, W*C) activation tile
                 sdn_ref, sup_ref,            # (H, H) row-shift matrices
                 tpool_ref,                   # (WC, WC) 3x3 avg-pool (W dir, /9)
                 m_ref, p_ref, q_ref,         # mask / stats kron matrices
                 wa_ref, ba_ref,              # stage A: [conv3 | mlp_shared]
                 wb_ref, bb_ref,              # stage B (blend-folded): -> [g_final | b_final]
                 wc1_ref, bc1_ref,            # conv_1
                 o_ref):
    f = f_ref[0].astype(jnp.float32)          # (H, WC), lane-dense
    H, WC = f.shape
    sdn = sdn_ref[...]
    sup = sup_ref[...]

    def shifts(x):
        # rows shifted by +/-1 with zero boundary rows (3x3 halo in H)
        xdn = jnp.dot(sdn, x, preferred_element_type=jnp.float32)   # x[h-1]
        xup = jnp.dot(sup, x, preferred_element_type=jnp.float32)   # x[h+1]
        return xdn, xup

    def pool3(x):
        # 3x3 avg pool, stride 1, pad 1, count_include_pad (divisor 9)
        xdn, xup = shifts(x)
        return jnp.dot(x + xdn + xup, tpool_ref[...],
                       preferred_element_type=jnp.float32)

    def conv_stage(x, w_ref, b_ref):
        # sum_dy shift_dy(x) @ B_dy + bias  ==  3x3 "SAME" conv in this layout
        xdn, xup = shifts(x)
        acc = jnp.dot(xdn, w_ref[0], preferred_element_type=jnp.float32)
        acc = acc + jnp.dot(x, w_ref[1], preferred_element_type=jnp.float32)
        acc = acc + jnp.dot(xup, w_ref[2], preferred_element_type=jnp.float32)
        return acc + b_ref[...]

    # --- local (3x3) statistics -> spatial sigmoid mask ---
    m1 = pool3(f)
    rm1 = pool3((f - m1) ** 2)
    smask = _sigmoid(jnp.dot(rm1, m_ref[...], preferred_element_type=jnp.float32))
    swx = smask * f

    # --- global (per-channel) statistics -> channel mask + instance norm ---
    m2 = jnp.dot(jnp.sum(f, axis=0, keepdims=True), p_ref[...],
                 preferred_element_type=jnp.float32)                # (1, WC)
    d2 = (f - m2) ** 2
    rm2 = jnp.dot(jnp.sum(d2, axis=0, keepdims=True), p_ref[...],
                  preferred_element_type=jnp.float32)               # (1, WC)
    cmask = _sigmoid(jnp.dot(rm2, q_ref[...], preferred_element_type=jnp.float32))
    cwx = cmask * f
    normalized = (f - m2) * lax.rsqrt(rm2 + 1e-5)

    # --- stage A: fused [conv3 | mlp_shared] + ReLU ---
    xa = jnp.concatenate([swx, cwx], axis=1)                        # (H, 2*WC)
    ya = jnp.maximum(conv_stage(xa, wa_ref, ba_ref), 0.0)           # [middle_avg | active]

    # --- stage B: fused + blend-folded -> [gamma_final | beta_final] ---
    yb = conv_stage(ya, wb_ref, bb_ref)                             # (H, 2*WC)
    gamma_final = yb[:, 0:WC]
    beta_final = yb[:, WC:2 * WC]

    # --- SPADE modulation + conv_1 ---
    pre = normalized * (1.0 + gamma_final) + beta_final
    out = conv_stage(pre, wc1_ref, bc1_ref)                         # conv_1
    o_ref[0] = out.astype(o_ref.dtype)


# --------------------------------- wrapper ------------------------------------

def spade_forward(f, p):
    """f: (N, H, W, C) NHWC activations (PyTorch NCHW transposed)."""
    N, H, W, C = f.shape
    WC = W * C

    def banded(w_dy):
        # w_dy: (3, Cin, Cout) taps of a conv row -> (W*Cin, W*Cout) banded matrix
        return sum(jnp.kron(jnp.eye(W, k=1 - dx, dtype=jnp.float32),
                            w_dy[dx].astype(jnp.float32))
                   for dx in range(3))

    def tile_bias(b):
        b = b.astype(jnp.float32)
        return jnp.tile(b, W).reshape(1, W * b.shape[0])

    zero = jnp.zeros((WC, WC), jnp.float32)

    # H halo shift matrices: (Sdn @ x)[h] = x[h-1], (Sup @ x)[h] = x[h+1]
    sdn = jnp.eye(H, k=-1, dtype=jnp.float32)
    sup = jnp.eye(H, k=1, dtype=jnp.float32)

    # 3x3 avg-pool: W-direction taps + /9 folded into a banded matrix
    tri = jnp.eye(W, k=-1) + jnp.eye(W) + jnp.eye(W, k=1)
    tpool = (jnp.kron(tri, jnp.eye(C)) / 9.0).astype(jnp.float32)

    # spatial mask: sum_c rm1[.,w,c] * w1[c], broadcast back over the C lanes of w
    m_mat = jnp.kron(jnp.eye(W),
                     jnp.broadcast_to(p["w1"].astype(jnp.float32)[:, None],
                                      (C, C))).astype(jnp.float32)
    # per-channel mean over (H, W): reduce across w-groups, keep channel lanes
    p_mat = (jnp.kron(jnp.ones((W, W)), jnp.eye(C)) / (H * W)).astype(jnp.float32)
    # channel mask: rm2 (repeated over w) -> w2 applied per channel
    q_mat = (jnp.kron(jnp.ones((W, W)), p["w2"].astype(jnp.float32)) / W
             ).astype(jnp.float32)

    def block_diag2(a, b):
        return jnp.concatenate(
            [jnp.concatenate([a, zero], axis=1),
             jnp.concatenate([zero, b], axis=1)], axis=0)

    # stage A weights: input [swx | cwx] -> output [middle_avg | active]
    wa = jnp.stack([block_diag2(banded(p["conv3_w"][dy]),
                                banded(p["mlp_shared_w"][dy]))
                    for dy in range(3)])                            # (3, 2WC, 2WC)
    ba = jnp.concatenate([tile_bias(p["conv3_b"]),
                          tile_bias(p["mlp_shared_b"])], axis=1)    # (1, 2WC)

    # stage B weights with sigmoid blending folded in:
    #   [middle_avg | active] -> [gamma_final | beta_final]
    alpha_g = _sigmoid(p["blending_gamma"].astype(jnp.float32))
    alpha_b = _sigmoid(p["blending_beta"].astype(jnp.float32))

    def wb_dy(dy):
        top = jnp.concatenate([alpha_g * banded(p["conv_gamma_w"][dy]),
                               alpha_b * banded(p["conv_beta_w"][dy])], axis=1)
        bot = jnp.concatenate([(1.0 - alpha_g) * banded(p["mlp_gamma_w"][dy]),
                               (1.0 - alpha_b) * banded(p["mlp_beta_w"][dy])], axis=1)
        return jnp.concatenate([top, bot], axis=0)
    wb = jnp.stack([wb_dy(dy) for dy in range(3)])                  # (3, 2WC, 2WC)
    bb = jnp.concatenate(
        [alpha_g * tile_bias(p["conv_gamma_b"]) + (1.0 - alpha_g) * tile_bias(p["mlp_gamma_b"]),
         alpha_b * tile_bias(p["conv_beta_b"]) + (1.0 - alpha_b) * tile_bias(p["mlp_beta_b"])],
        axis=1)                                                     # (1, 2WC)

    wc1 = jnp.stack([banded(p["conv_1_w"][dy]) for dy in range(3)])  # (3, WC, WC)
    bc1 = tile_bias(p["conv_1_b"])                                   # (1, WC)

    f2 = f.reshape(N, H, WC).astype(jnp.float32)                     # lane-dense

    weights = [sdn, sup, tpool, m_mat, p_mat, q_mat,
               wa, ba, wb, bb, wc1, bc1]

    def rep_spec(x):
        zeros = (0,) * x.ndim
        return pl.BlockSpec(x.shape, lambda n, _z=zeros: _z)

    out = pl.pallas_call(
        spade_kernel,
        out_shape=jax.ShapeDtypeStruct((N, H, WC), jnp.float32),
        grid=(N,),
        in_specs=[pl.BlockSpec((1, H, WC), lambda n: (n, 0, 0))]
                 + [rep_spec(x) for x in weights],
        out_specs=pl.BlockSpec((1, H, WC), lambda n: (n, 0, 0)),
        compiler_params=pltpu.CompilerParams(
            dimension_semantics=("parallel",)),
    )(f2, *weights)
    return out.reshape(N, H, W, C)


# ----------------------------- pure-JAX reference -----------------------------

def spade_reference(f, p):
    hp = lax.Precision.HIGHEST

    def conv3(x, w, bias, relu=False):
        y = lax.conv_general_dilated(
            x, w, (1, 1), "SAME",
            dimension_numbers=("NHWC", "HWIO", "NHWC"), precision=hp)
        y = y + bias.reshape(1, 1, 1, -1)
        return jnp.maximum(y, 0.0) if relu else y

    def pool3(x):
        s = lax.reduce_window(x, jnp.float32(0.0), lax.add,
                              (1, 3, 3, 1), (1, 1, 1, 1),
                              [(0, 0), (1, 1), (1, 1), (0, 0)])
        return s / 9.0

    def sig(x):
        return 1.0 / (1.0 + jnp.exp(-x))

    m1 = pool3(f)
    rm1 = pool3((f - m1) ** 2)
    smask = sig(jnp.einsum("nhwc,c->nhw", rm1, p["w1"], precision=hp)[..., None])
    swx = smask * f

    m2 = jnp.mean(f, axis=(1, 2), keepdims=True)
    rm2 = jnp.mean((f - m2) ** 2, axis=(1, 2), keepdims=True)
    cmask = sig(jnp.einsum("nhwc,cd->nhwd", rm2, p["w2"], precision=hp))
    cwx = cmask * f

    normalized = (f - m2) * lax.rsqrt(rm2 + 1e-5)

    middle_avg = conv3(swx, p["conv3_w"], p["conv3_b"], relu=True)
    gamma_avg = conv3(middle_avg, p["conv_gamma_w"], p["conv_gamma_b"])
    beta_avg = conv3(middle_avg, p["conv_beta_w"], p["conv_beta_b"])

    active = conv3(cwx, p["mlp_shared_w"], p["mlp_shared_b"], relu=True)
    gamma_spade = conv3(active, p["mlp_gamma_w"], p["mlp_gamma_b"])
    beta_spade = conv3(active, p["mlp_beta_w"], p["mlp_beta_b"])

    ga = sig(p["blending_gamma"])
    ba = sig(p["blending_beta"])
    gamma_final = ga * gamma_avg + (1.0 - ga) * gamma_spade
    beta_final = ba * beta_avg + (1.0 - ba) * beta_spade

    out = normalized * (1 + gamma_final) + beta_final
    return conv3(out, p["conv_1_w"], p["conv_1_b"])


# ------------------------------ parameter init --------------------------------

def init_params(key, C):
    ks = jax.random.split(key, 16)

    def w3(k):
        return jax.random.normal(k, (3, 3, C, C), jnp.float32) * 0.1

    def bias(k):
        return jax.random.normal(k, (C,), jnp.float32) * 0.05

    return {
        "w1": jax.random.normal(ks[0], (C,), jnp.float32) * 0.2,    # 1x1 conv C->1, no bias
        "w2": jax.random.normal(ks[1], (C, C), jnp.float32) * 0.2,  # 1x1 conv C->C, no bias
        "conv3_w": w3(ks[2]), "conv3_b": bias(ks[3]),
        "mlp_shared_w": w3(ks[4]), "mlp_shared_b": bias(ks[5]),
        "conv_gamma_w": w3(ks[6]), "conv_gamma_b": bias(ks[7]),
        "conv_beta_w": w3(ks[8]), "conv_beta_b": bias(ks[9]),
        "mlp_gamma_w": w3(ks[10]), "mlp_gamma_b": bias(ks[11]),
        "mlp_beta_w": w3(ks[12]), "mlp_beta_b": bias(ks[13]),
        "conv_1_w": w3(ks[14]), "conv_1_b": bias(ks[15]),
        "blending_gamma": jnp.zeros((), jnp.float32),               # nn.Parameter(zeros(1))
        "blending_beta": jnp.zeros((), jnp.float32),
    }


# ----------------------------------- main --------------------------------------

if __name__ == "__main__":
    key = jax.random.PRNGKey(0)
    kf, kp = jax.random.split(key)

    # in_chan = out_chan = 8, reduce_ratio = 1 (NCHW [2, 8, 16, 16] -> NHWC)
    N, C, H, W = 2, 8, 16, 16
    f = jax.random.normal(kf, (N, H, W, C), jnp.float32)
    params = init_params(kp, C)

    fwd = jax.jit(spade_forward)
    out = jax.block_until_ready(fwd(f, params))
    assert out.shape == (N, H, W, C)

    ref = spade_reference(f, params)
    if not jnp.allclose(out, ref, atol=2e-3, rtol=2e-3):
        max_err = float(jnp.max(jnp.abs(out - ref)))
        raise AssertionError(f"Pallas output mismatch vs reference, max abs err = {max_err}")

    print("KERNEL_OK")
</pallas_src>

<mosaic_0001>
module attributes {stable_mosaic.version = 11 : i64} {
  func.func @spade_kernel(%arg0: i32, %arg1: memref<1x16x128xf32, #tpu.memory_space<vmem>>, %arg2: memref<16x16xf32, #tpu.memory_space<vmem>>, %arg3: memref<16x16xf32, #tpu.memory_space<vmem>>, %arg4: memref<128x128xf32, #tpu.memory_space<vmem>>, %arg5: memref<128x128xf32, #tpu.memory_space<vmem>>, %arg6: memref<128x128xf32, #tpu.memory_space<vmem>>, %arg7: memref<128x128xf32, #tpu.memory_space<vmem>>, %arg8: memref<3x256x256xf32, #tpu.memory_space<vmem>>, %arg9: memref<1x256xf32, #tpu.memory_space<vmem>>, %arg10: memref<3x256x256xf32, #tpu.memory_space<vmem>>, %arg11: memref<1x256xf32, #tpu.memory_space<vmem>>, %arg12: memref<3x128x128xf32, #tpu.memory_space<vmem>>, %arg13: memref<1x128xf32, #tpu.memory_space<vmem>>, %arg14: memref<1x16x128xf32, #tpu.memory_space<vmem>>) attributes {dimension_semantics = [#tpu.dimension_semantics<parallel>], iteration_bounds = array<i64: 2>, scalar_prefetch = 0 : i64, scratch_operands = 0 : i64, tpu.core_type = #tpu.core_type<tc>, window_params = [{transform_indices = @transform_0, window_bounds = array<i64: 1, 16, 128>}, {pipeline_mode = #tpu.pipeline_mode<synchronous>, transform_indices = @transform_1, window_bounds = array<i64: 16, 16>}, {pipeline_mode = #tpu.pipeline_mode<synchronous>, transform_indices = @transform_2, window_bounds = array<i64: 16, 16>}, {pipeline_mode = #tpu.pipeline_mode<synchronous>, transform_indices = @transform_3, window_bounds = array<i64: 128, 128>}, {pipeline_mode = #tpu.pipeline_mode<synchronous>, transform_indices = @transform_4, window_bounds = array<i64: 128, 128>}, {pipeline_mode = #tpu.pipeline_mode<synchronous>, transform_indices = @transform_5, window_bounds = array<i64: 128, 128>}, {pipeline_mode = #tpu.pipeline_mode<synchronous>, transform_indices = @transform_6, window_bounds = array<i64: 128, 128>}, {pipeline_mode = #tpu.pipeline_mode<synchronous>, transform_indices = @transform_7, window_bounds = array<i64: 3, 256, 256>}, {pipeline_mode = #tpu.pipeline_mode<synchronous>, transform_indices = @transform_8, window_bounds = array<i64: 1, 256>}, {pipeline_mode = #tpu.pipeline_mode<synchronous>, transform_indices = @transform_9, window_bounds = array<i64: 3, 256, 256>}, {pipeline_mode = #tpu.pipeline_mode<synchronous>, transform_indices = @transform_10, window_bounds = array<i64: 1, 256>}, {pipeline_mode = #tpu.pipeline_mode<synchronous>, transform_indices = @transform_11, window_bounds = array<i64: 3, 128, 128>}, {pipeline_mode = #tpu.pipeline_mode<synchronous>, transform_indices = @transform_12, window_bounds = array<i64: 1, 128>}, {transform_indices = @transform_13, window_bounds = array<i64: 1, 16, 128>}]} {
    %c0 = arith.constant 0 : index
    %c0_0 = arith.constant 0 : index
    %c0_1 = arith.constant 0 : index
    %0 = vector.load %arg1[%c0, %c0_0, %c0_1] : memref<1x16x128xf32, #tpu.memory_space<vmem>>, vector<1x16x128xf32>
    %1 = vector.shape_cast %0 : vector<1x16x128xf32> to vector<16x128xf32>
    %c0_2 = arith.constant 0 : index
    %c0_3 = arith.constant 0 : index
    %2 = vector.load %arg2[%c0_2, %c0_3] : memref<16x16xf32, #tpu.memory_space<vmem>>, vector<16x16xf32>
    %c0_4 = arith.constant 0 : index
    %c0_5 = arith.constant 0 : index
    %3 = vector.load %arg3[%c0_4, %c0_5] : memref<16x16xf32, #tpu.memory_space<vmem>>, vector<16x16xf32>
    %cst = arith.constant dense<0.000000e+00> : vector<16x128xf32>
    %4 = tpu.matmul %2, %1, %cst {dimension_numbers = #tpu.dot_dimension_numbers<[1], [0], [0], [1], [0, 0, 1, 1], [], []>} : vector<16x16xf32>, vector<16x128xf32>, vector<16x128xf32> -> vector<16x128xf32>
    %cst_6 = arith.constant dense<0.000000e+00> : vector<16x128xf32>
    %5 = tpu.matmul %3, %1, %cst_6 {dimension_numbers = #tpu.dot_dimension_numbers<[1], [0], [0], [1], [0, 0, 1, 1], [], []>} : vector<16x16xf32>, vector<16x128xf32>, vector<16x128xf32> -> vector<16x128xf32>
    %6 = arith.addf %1, %4 : vector<16x128xf32>
    %7 = arith.addf %6, %5 : vector<16x128xf32>
    %c0_7 = arith.constant 0 : index
    %c0_8 = arith.constant 0 : index
    %8 = vector.load %arg4[%c0_7, %c0_8] : memref<128x128xf32, #tpu.memory_space<vmem>>, vector<128x128xf32>
    %cst_9 = arith.constant dense<0.000000e+00> : vector<16x128xf32>
    %9 = tpu.matmul %7, %8, %cst_9 {dimension_numbers = #tpu.dot_dimension_numbers<[1], [0], [0], [1], [0, 0, 1, 1], [], []>} : vector<16x128xf32>, vector<128x128xf32>, vector<16x128xf32> -> vector<16x128xf32>
    %10 = arith.subf %1, %9 : vector<16x128xf32>
    %11 = arith.mulf %10, %10 : vector<16x128xf32>
    %cst_10 = arith.constant dense<0.000000e+00> : vector<16x128xf32>
    %12 = tpu.matmul %2, %11, %cst_10 {dimension_numbers = #tpu.dot_dimension_numbers<[1], [0], [0], [1], [0, 0, 1, 1], [], []>} : vector<16x16xf32>, vector<16x128xf32>, vector<16x128xf32> -> vector<16x128xf32>
    %cst_11 = arith.constant dense<0.000000e+00> : vector<16x128xf32>
    %13 = tpu.matmul %3, %11, %cst_11 {dimension_numbers = #tpu.dot_dimension_numbers<[1], [0], [0], [1], [0, 0, 1, 1], [], []>} : vector<16x16xf32>, vector<16x128xf32>, vector<16x128xf32> -> vector<16x128xf32>
    %14 = arith.addf %11, %12 : vector<16x128xf32>
    %15 = arith.addf %14, %13 : vector<16x128xf32>
    %c0_12 = arith.constant 0 : index
    %c0_13 = arith.constant 0 : index
    %16 = vector.load %arg4[%c0_12, %c0_13] : memref<128x128xf32, #tpu.memory_space<vmem>>, vector<128x128xf32>
    %cst_14 = arith.constant dense<0.000000e+00> : vector<16x128xf32>
    %17 = tpu.matmul %15, %16, %cst_14 {dimension_numbers = #tpu.dot_dimension_numbers<[1], [0], [0], [1], [0, 0, 1, 1], [], []>} : vector<16x128xf32>, vector<128x128xf32>, vector<16x128xf32> -> vector<16x128xf32>
    %c0_15 = arith.constant 0 : index
    %c0_16 = arith.constant 0 : index
    %18 = vector.load %arg5[%c0_15, %c0_16] : memref<128x128xf32, #tpu.memory_space<vmem>>, vector<128x128xf32>
    %cst_17 = arith.constant dense<0.000000e+00> : vector<16x128xf32>
    %19 = tpu.matmul %17, %18, %cst_17 {dimension_numbers = #tpu.dot_dimension_numbers<[1], [0], [0], [1], [0, 0, 1, 1], [], []>} : vector<16x128xf32>, vector<128x128xf32>, vector<16x128xf32> -> vector<16x128xf32>
    %cst_18 = arith.constant 0.000000e+00 : f32
    %20 = vector.broadcast %cst_18 : f32 to vector<16x128xf32>
    %21 = arith.subf %20, %19 : vector<16x128xf32>
    %22 = math.exp %21 : vector<16x128xf32>
    %cst_19 = arith.constant 1.000000e+00 : f32
    %23 = vector.broadcast %cst_19 : f32 to vector<16x128xf32>
    %24 = arith.addf %23, %22 : vector<16x128xf32>
    %cst_20 = arith.constant 1.000000e+00 : f32
    %25 = vector.broadcast %cst_20 : f32 to vector<16x128xf32>
    %26 = arith.divf %25, %24 : vector<16x128xf32>
    %27 = arith.mulf %26, %1 : vector<16x128xf32>
    %cst_21 = arith.constant dense<0.000000e+00> : vector<128xf32>
    %28 = vector.multi_reduction <add>, %1, %cst_21 [0] : vector<16x128xf32> to vector<128xf32>
    %29 = vector.shape_cast %28 : vector<128xf32> to vector<1x128xf32>
    %c0_22 = arith.constant 0 : index
    %c0_23 = arith.constant 0 : index
    %30 = vector.load %arg6[%c0_22, %c0_23] : memref<128x128xf32, #tpu.memory_space<vmem>>, vector<128x128xf32>
    %cst_24 = arith.constant dense<0.000000e+00> : vector<1x128xf32>
    %31 = tpu.matmul %29, %30, %cst_24 {dimension_numbers = #tpu.dot_dimension_numbers<[1], [0], [0], [1], [0, 0, 1, 1], [], []>} : vector<1x128xf32>, vector<128x128xf32>, vector<1x128xf32> -> vector<1x128xf32>
    %32 = vector.broadcast %31 : vector<1x128xf32> to vector<16x128xf32>
    %33 = arith.subf %1, %32 : vector<16x128xf32>
    %34 = arith.mulf %33, %33 : vector<16x128xf32>
    %cst_25 = arith.constant dense<0.000000e+00> : vector<128xf32>
    %35 = vector.multi_reduction <add>, %34, %cst_25 [0] : vector<16x128xf32> to vector<128xf32>
    %36 = vector.shape_cast %35 : vector<128xf32> to vector<1x128xf32>
    %c0_26 = arith.constant 0 : index
    %c0_27 = arith.constant 0 : index
    %37 = vector.load %arg6[%c0_26, %c0_27] : memref<128x128xf32, #tpu.memory_space<vmem>>, vector<128x128xf32>
    %cst_28 = arith.constant dense<0.000000e+00> : vector<1x128xf32>
    %38 = tpu.matmul %36, %37, %cst_28 {dimension_numbers = #tpu.dot_dimension_numbers<[1], [0], [0], [1], [0, 0, 1, 1], [], []>} : vector<1x128xf32>, vector<128x128xf32>, vector<1x128xf32> -> vector<1x128xf32>
    %c0_29 = arith.constant 0 : index
    %c0_30 = arith.constant 0 : index
    %39 = vector.load %arg7[%c0_29, %c0_30] : memref<128x128xf32, #tpu.memory_space<vmem>>, vector<128x128xf32>
    %cst_31 = arith.constant dense<0.000000e+00> : vector<1x128xf32>
    %40 = tpu.matmul %38, %39, %cst_31 {dimension_numbers = #tpu.dot_dimension_numbers<[1], [0], [0], [1], [0, 0, 1, 1], [], []>} : vector<1x128xf32>, vector<128x128xf32>, vector<1x128xf32> -> vector<1x128xf32>
    %cst_32 = arith.constant 0.000000e+00 : f32
    %41 = vector.broadcast %cst_32 : f32 to vector<1x128xf32>
    %42 = arith.subf %41, %40 : vector<1x128xf32>
    %43 = math.exp %42 : vector<1x128xf32>
    %cst_33 = arith.constant 1.000000e+00 : f32
    %44 = vector.broadcast %cst_33 : f32 to vector<1x128xf32>
    %45 = arith.addf %44, %43 : vector<1x128xf32>
    %cst_34 = arith.constant 1.000000e+00 : f32
    %46 = vector.broadcast %cst_34 : f32 to vector<1x128xf32>
    %47 = arith.divf %46, %45 : vector<1x128xf32>
    %48 = vector.broadcast %47 : vector<1x128xf32> to vector<16x128xf32>
    %49 = arith.mulf %48, %1 : vector<16x128xf32>
    %50 = vector.broadcast %31 : vector<1x128xf32> to vector<16x128xf32>
    %51 = arith.subf %1, %50 : vector<16x128xf32>
    %cst_35 = arith.constant 9.99999974E-6 : f32
    %52 = vector.broadcast %cst_35 : f32 to vector<1x128xf32>
    %53 = arith.addf %38, %52 : vector<1x128xf32>
    %54 = math.rsqrt %53 : vector<1x128xf32>
    %55 = vector.broadcast %54 : vector<1x128xf32> to vector<16x128xf32>
    %56 = arith.mulf %51, %55 : vector<16x128xf32>
    %57 = tpu.concatenate %27, %49 in 1 : vector<16x128xf32>, vector<16x128xf32> -> vector<16x256xf32>
    %cst_36 = arith.constant dense<0.000000e+00> : vector<16x256xf32>
    %58 = tpu.matmul %2, %57, %cst_36 {dimension_numbers = #tpu.dot_dimension_numbers<[1], [0], [0], [1], [0, 0, 1, 1], [], []>} : vector<16x16xf32>, vector<16x256xf32>, vector<16x256xf32> -> vector<16x256xf32>
    %cst_37 = arith.constant dense<0.000000e+00> : vector<16x256xf32>
    %59 = tpu.matmul %3, %57, %cst_37 {dimension_numbers = #tpu.dot_dimension_numbers<[1], [0], [0], [1], [0, 0, 1, 1], [], []>} : vector<16x16xf32>, vector<16x256xf32>, vector<16x256xf32> -> vector<16x256xf32>
    %c0_38 = arith.constant 0 : index
    %c0_39 = arith.constant 0 : index
    %c0_40 = arith.constant 0 : index
    %60 = vector.load %arg8[%c0_38, %c0_39, %c0_40] : memref<3x256x256xf32, #tpu.memory_space<vmem>>, vector<1x256x256xf32>
    %61 = vector.shape_cast %60 : vector<1x256x256xf32> to vector<256x256xf32>
    %cst_41 = arith.constant dense<0.000000e+00> : vector<16x256xf32>
    %62 = tpu.matmul %58, %61, %cst_41 {dimension_numbers = #tpu.dot_dimension_numbers<[1], [0], [0], [1], [0, 0, 1, 1], [], []>} : vector<16x256xf32>, vector<256x256xf32>, vector<16x256xf32> -> vector<16x256xf32>
    %c1 = arith.constant 1 : index
    %c0_42 = arith.constant 0 : index
    %c0_43 = arith.constant 0 : index
    %63 = vector.load %arg8[%c1, %c0_42, %c0_43] : memref<3x256x256xf32, #tpu.memory_space<vmem>>, vector<1x256x256xf32>
    %64 = vector.shape_cast %63 : vector<1x256x256xf32> to vector<256x256xf32>
    %cst_44 = arith.constant dense<0.000000e+00> : vector<16x256xf32>
    %65 = tpu.matmul %57, %64, %cst_44 {dimension_numbers = #tpu.dot_dimension_numbers<[1], [0], [0], [1], [0, 0, 1, 1], [], []>} : vector<16x256xf32>, vector<256x256xf32>, vector<16x256xf32> -> vector<16x256xf32>
    %66 = arith.addf %62, %65 : vector<16x256xf32>
    %c2 = arith.constant 2 : index
    %c0_45 = arith.constant 0 : index
    %c0_46 = arith.constant 0 : index
    %67 = vector.load %arg8[%c2, %c0_45, %c0_46] : memref<3x256x256xf32, #tpu.memory_space<vmem>>, vector<1x256x256xf32>
    %68 = vector.shape_cast %67 : vector<1x256x256xf32> to vector<256x256xf32>
    %cst_47 = arith.constant dense<0.000000e+00> : vector<16x256xf32>
    %69 = tpu.matmul %59, %68, %cst_47 {dimension_numbers = #tpu.dot_dimension_numbers<[1], [0], [0], [1], [0, 0, 1, 1], [], []>} : vector<16x256xf32>, vector<256x256xf32>, vector<16x256xf32> -> vector<16x256xf32>
    %70 = arith.addf %66, %69 : vector<16x256xf32>
    %c0_48 = arith.constant 0 : index
    %c0_49 = arith.constant 0 : index
    %71 = vector.load %arg9[%c0_48, %c0_49] : memref<1x256xf32, #tpu.memory_space<vmem>>, vector<1x256xf32>
    %72 = vector.broadcast %71 : vector<1x256xf32> to vector<16x256xf32>
    %73 = arith.addf %70, %72 : vector<16x256xf32>
    %cst_50 = arith.constant 0.000000e+00 : f32
    %74 = vector.broadcast %cst_50 : f32 to vector<16x256xf32>
    %75 = arith.maximumf %73, %74 : vector<16x256xf32>
    %cst_51 = arith.constant dense<0.000000e+00> : vector<16x256xf32>
    %76 = tpu.matmul %2, %75, %cst_51 {dimension_numbers = #tpu.dot_dimension_numbers<[1], [0], [0], [1], [0, 0, 1, 1], [], []>} : vector<16x16xf32>, vector<16x256xf32>, vector<16x256xf32> -> vector<16x256xf32>
    %cst_52 = arith.constant dense<0.000000e+00> : vector<16x256xf32>
    %77 = tpu.matmul %3, %75, %cst_52 {dimension_numbers = #tpu.dot_dimension_numbers<[1], [0], [0], [1], [0, 0, 1, 1], [], []>} : vector<16x16xf32>, vector<16x256xf32>, vector<16x256xf32> -> vector<16x256xf32>
    %c0_53 = arith.constant 0 : index
    %c0_54 = arith.constant 0 : index
    %c0_55 = arith.constant 0 : index
    %78 = vector.load %arg10[%c0_53, %c0_54, %c0_55] : memref<3x256x256xf32, #tpu.memory_space<vmem>>, vector<1x256x256xf32>
    %79 = vector.shape_cast %78 : vector<1x256x256xf32> to vector<256x256xf32>
    %cst_56 = arith.constant dense<0.000000e+00> : vector<16x256xf32>
    %80 = tpu.matmul %76, %79, %cst_56 {dimension_numbers = #tpu.dot_dimension_numbers<[1], [0], [0], [1], [0, 0, 1, 1], [], []>} : vector<16x256xf32>, vector<256x256xf32>, vector<16x256xf32> -> vector<16x256xf32>
    %c1_57 = arith.constant 1 : index
    %c0_58 = arith.constant 0 : index
    %c0_59 = arith.constant 0 : index
    %81 = vector.load %arg10[%c1_57, %c0_58, %c0_59] : memref<3x256x256xf32, #tpu.memory_space<vmem>>, vector<1x256x256xf32>
    %82 = vector.shape_cast %81 : vector<1x256x256xf32> to vector<256x256xf32>
    %cst_60 = arith.constant dense<0.000000e+00> : vector<16x256xf32>
    %83 = tpu.matmul %75, %82, %cst_60 {dimension_numbers = #tpu.dot_dimension_numbers<[1], [0], [0], [1], [0, 0, 1, 1], [], []>} : vector<16x256xf32>, vector<256x256xf32>, vector<16x256xf32> -> vector<16x256xf32>
    %84 = arith.addf %80, %83 : vector<16x256xf32>
    %c2_61 = arith.constant 2 : index
    %c0_62 = arith.constant 0 : index
    %c0_63 = arith.constant 0 : index
    %85 = vector.load %arg10[%c2_61, %c0_62, %c0_63] : memref<3x256x256xf32, #tpu.memory_space<vmem>>, vector<1x256x256xf32>
    %86 = vector.shape_cast %85 : vector<1x256x256xf32> to vector<256x256xf32>
    %cst_64 = arith.constant dense<0.000000e+00> : vector<16x256xf32>
    %87 = tpu.matmul %77, %86, %cst_64 {dimension_numbers = #tpu.dot_dimension_numbers<[1], [0], [0], [1], [0, 0, 1, 1], [], []>} : vector<16x256xf32>, vector<256x256xf32>, vector<16x256xf32> -> vector<16x256xf32>
    %88 = arith.addf %84, %87 : vector<16x256xf32>
    %c0_65 = arith.constant 0 : index
    %c0_66 = arith.constant 0 : index
    %89 = vector.load %arg11[%c0_65, %c0_66] : memref<1x256xf32, #tpu.memory_space<vmem>>, vector<1x256xf32>
    %90 = vector.broadcast %89 : vector<1x256xf32> to vector<16x256xf32>
    %91 = arith.addf %88, %90 : vector<16x256xf32>
    %92 = vector.extract_strided_slice %91 {offsets = [0, 0], sizes = [16, 128], strides = [1, 1]} : vector<16x256xf32> to vector<16x128xf32>
    %93 = vector.extract_strided_slice %91 {offsets = [0, 128], sizes = [16, 128], strides = [1, 1]} : vector<16x256xf32> to vector<16x128xf32>
    %cst_67 = arith.constant 1.000000e+00 : f32
    %94 = vector.broadcast %cst_67 : f32 to vector<16x128xf32>
    %95 = arith.addf %94, %92 : vector<16x128xf32>
    %96 = arith.mulf %56, %95 : vector<16x128xf32>
    %97 = arith.addf %96, %93 : vector<16x128xf32>
    %cst_68 = arith.constant dense<0.000000e+00> : vector<16x128xf32>
    %98 = tpu.matmul %2, %97, %cst_68 {dimension_numbers = #tpu.dot_dimension_numbers<[1], [0], [0], [1], [0, 0, 1, 1], [], []>} : vector<16x16xf32>, vector<16x128xf32>, vector<16x128xf32> -> vector<16x128xf32>
    %cst_69 = arith.constant dense<0.000000e+00> : vector<16x128xf32>
    %99 = tpu.matmul %3, %97, %cst_69 {dimension_numbers = #tpu.dot_dimension_numbers<[1], [0], [0], [1], [0, 0, 1, 1], [], []>} : vector<16x16xf32>, vector<16x128xf32>, vector<16x128xf32> -> vector<16x128xf32>
    %c0_70 = arith.constant 0 : index
    %c0_71 = arith.constant 0 : index
    %c0_72 = arith.constant 0 : index
    %100 = vector.load %arg12[%c0_70, %c0_71, %c0_72] : memref<3x128x128xf32, #tpu.memory_space<vmem>>, vector<1x128x128xf32>
    %101 = vector.shape_cast %100 : vector<1x128x128xf32> to vector<128x128xf32>
    %cst_73 = arith.constant dense<0.000000e+00> : vector<16x128xf32>
    %102 = tpu.matmul %98, %101, %cst_73 {dimension_numbers = #tpu.dot_dimension_numbers<[1], [0], [0], [1], [0, 0, 1, 1], [], []>} : vector<16x128xf32>, vector<128x128xf32>, vector<16x128xf32> -> vector<16x128xf32>
    %c1_74 = arith.constant 1 : index
    %c0_75 = arith.constant 0 : index
    %c0_76 = arith.constant 0 : index
    %103 = vector.load %arg12[%c1_74, %c0_75, %c0_76] : memref<3x128x128xf32, #tpu.memory_space<vmem>>, vector<1x128x128xf32>
    %104 = vector.shape_cast %103 : vector<1x128x128xf32> to vector<128x128xf32>
    %cst_77 = arith.constant dense<0.000000e+00> : vector<16x128xf32>
    %105 = tpu.matmul %97, %104, %cst_77 {dimension_numbers = #tpu.dot_dimension_numbers<[1], [0], [0], [1], [0, 0, 1, 1], [], []>} : vector<16x128xf32>, vector<128x128xf32>, vector<16x128xf32> -> vector<16x128xf32>
    %106 = arith.addf %102, %105 : vector<16x128xf32>
    %c2_78 = arith.constant 2 : index
    %c0_79 = arith.constant 0 : index
    %c0_80 = arith.constant 0 : index
    %107 = vector.load %arg12[%c2_78, %c0_79, %c0_80] : memref<3x128x128xf32, #tpu.memory_space<vmem>>, vector<1x128x128xf32>
    %108 = vector.shape_cast %107 : vector<1x128x128xf32> to vector<128x128xf32>
    %cst_81 = arith.constant dense<0.000000e+00> : vector<16x128xf32>
    %109 = tpu.matmul %99, %108, %cst_81 {dimension_numbers = #tpu.dot_dimension_numbers<[1], [0], [0], [1], [0, 0, 1, 1], [], []>} : vector<16x128xf32>, vector<128x128xf32>, vector<16x128xf32> -> vector<16x128xf32>
    %110 = arith.addf %106, %109 : vector<16x128xf32>
    %c0_82 = arith.constant 0 : index
    %c0_83 = arith.constant 0 : index
    %111 = vector.load %arg13[%c0_82, %c0_83] : memref<1x128xf32, #tpu.memory_space<vmem>>, vector<1x128xf32>
    %112 = vector.broadcast %111 : vector<1x128xf32> to vector<16x128xf32>
    %113 = arith.addf %110, %112 : vector<16x128xf32>
    %c0_84 = arith.constant 0 : index
    %c0_85 = arith.constant 0 : index
    %c0_86 = arith.constant 0 : index
    %114 = vector.load %arg14[%c0_84, %c0_85, %c0_86] : memref<1x16x128xf32, #tpu.memory_space<vmem>>, vector<1x16x128xf32>
    %115 = vector.shape_cast %114 : vector<1x16x128xf32> to vector<16x128xf32>
    %116 = vector.shape_cast %113 : vector<16x128xf32> to vector<1x16x128xf32>
    tpu.vector_store %arg14[%c0_84, %c0_85, %c0_86], %116 {strides = array<i32>} : memref<1x16x128xf32, #tpu.memory_space<vmem>>, vector<1x16x128xf32>,
    return
  }
  func.func @transform_0(%arg0: i32) -> (i32, i32, i32) {
    %c0_i32 = arith.constant 0 : i32
    %c0_i32_0 = arith.constant 0 : i32
    %c0_i32_1 = arith.constant 0 : i32
    return %arg0, %c0_i32, %c0_i32_0 : i32, i32, i32
  }
  func.func @transform_1(%arg0: i32) -> (i32, i32) {
    %c0_i32 = arith.constant 0 : i32
    %c0_i32_0 = arith.constant 0 : i32
    %c0_i32_1 = arith.constant 0 : i32
    return %c0_i32, %c0_i32_0 : i32, i32
  }
  func.func @transform_2(%arg0: i32) -> (i32, i32) {
    %c0_i32 = arith.constant 0 : i32
    %c0_i32_0 = arith.constant 0 : i32
    %c0_i32_1 = arith.constant 0 : i32
    return %c0_i32, %c0_i32_0 : i32, i32
  }
  func.func @transform_3(%arg0: i32) -> (i32, i32) {
    %c0_i32 = arith.constant 0 : i32
    %c0_i32_0 = arith.constant 0 : i32
    %c0_i32_1 = arith.constant 0 : i32
    return %c0_i32, %c0_i32_0 : i32, i32
  }
  func.func @transform_4(%arg0: i32) -> (i32, i32) {
    %c0_i32 = arith.constant 0 : i32
    %c0_i32_0 = arith.constant 0 : i32
    %c0_i32_1 = arith.constant 0 : i32
    return %c0_i32, %c0_i32_0 : i32, i32
  }
  func.func @transform_5(%arg0: i32) -> (i32, i32) {
    %c0_i32 = arith.constant 0 : i32
    %c0_i32_0 = arith.constant 0 : i32
    %c0_i32_1 = arith.constant 0 : i32
    return %c0_i32, %c0_i32_0 : i32, i32
  }
  func.func @transform_6(%arg0: i32) -> (i32, i32) {
    %c0_i32 = arith.constant 0 : i32
    %c0_i32_0 = arith.constant 0 : i32
    %c0_i32_1 = arith.constant 0 : i32
    return %c0_i32, %c0_i32_0 : i32, i32
  }
  func.func @transform_7(%arg0: i32) -> (i32, i32, i32) {
    %c0_i32 = arith.constant 0 : i32
    %c0_i32_0 = arith.constant 0 : i32
    %c0_i32_1 = arith.constant 0 : i32
    %c0_i32_2 = arith.constant 0 : i32
    return %c0_i32, %c0_i32_0, %c0_i32_1 : i32, i32, i32
  }
  func.func @transform_8(%arg0: i32) -> (i32, i32) {
    %c0_i32 = arith.constant 0 : i32
    %c0_i32_0 = arith.constant 0 : i32
    %c0_i32_1 = arith.constant 0 : i32
    return %c0_i32, %c0_i32_0 : i32, i32
  }
  func.func @transform_9(%arg0: i32) -> (i32, i32, i32) {
    %c0_i32 = arith.constant 0 : i32
    %c0_i32_0 = arith.constant 0 : i32
    %c0_i32_1 = arith.constant 0 : i32
    %c0_i32_2 = arith.constant 0 : i32
    return %c0_i32, %c0_i32_0, %c0_i32_1 : i32, i32, i32
  }
  func.func @transform_10(%arg0: i32) -> (i32, i32) {
    %c0_i32 = arith.constant 0 : i32
    %c0_i32_0 = arith.constant 0 : i32
    %c0_i32_1 = arith.constant 0 : i32
    return %c0_i32, %c0_i32_0 : i32, i32
  }
  func.func @transform_11(%arg0: i32) -> (i32, i32, i32) {
    %c0_i32 = arith.constant 0 : i32
    %c0_i32_0 = arith.constant 0 : i32
    %c0_i32_1 = arith.constant 0 : i32
    %c0_i32_2 = arith.constant 0 : i32
    return %c0_i32, %c0_i32_0, %c0_i32_1 : i32, i32, i32
  }
  func.func @transform_12(%arg0: i32) -> (i32, i32) {
    %c0_i32 = arith.constant 0 : i32
    %c0_i32_0 = arith.constant 0 : i32
    %c0_i32_1 = arith.constant 0 : i32
    return %c0_i32, %c0_i32_0 : i32, i32
  }
  func.func @transform_13(%arg0: i32) -> (i32, i32, i32) {
    %c0_i32 = arith.constant 0 : i32
    %c0_i32_0 = arith.constant 0 : i32
    %c0_i32_1 = arith.constant 0 : i32
    return %arg0, %c0_i32, %c0_i32_0 : i32, i32, i32
  }
}

</mosaic_0001>

<llo_original>
// kernel: spade_forward.1
$region0: #{spade_forward.1}
  #allocation0 [shape = 'u32[]', space=smem, size = 0x4, offset = 0x4, fixed_abs, tag = 'smem constant byte address 0x4 - core index']
  #allocation1 [shape = 'u32[72,128]{1,0:T(1,128)}', space=vmem, size = 0x9000, scoped, tag = 'internal scratch']
  %s0 = inlined_call_operand.vmem [shape: f32[2,16,128], index: 0, kind: input, shape index: {}]
  %s1 = inlined_call_operand.vmem [shape: f32[16,16], index: 1, kind: input, shape index: {}]
  %s2 = inlined_call_operand.vmem [shape: f32[16,16], index: 2, kind: input, shape index: {}]
  %s3 = inlined_call_operand.vmem [shape: f32[128,128], index: 3, kind: input, shape index: {}]
  %s4 = inlined_call_operand.vmem [shape: f32[128,128], index: 4, kind: input, shape index: {}]
  %s5 = inlined_call_operand.vmem [shape: f32[128,128], index: 5, kind: input, shape index: {}]
  %s6 = inlined_call_operand.vmem [shape: f32[128,128], index: 6, kind: input, shape index: {}]
  %s7 = inlined_call_operand.vmem [shape: f32[3,256,256], index: 7, kind: input, shape index: {}]
  %s8 = inlined_call_operand.vmem [shape: f32[1,256], index: 8, kind: input, shape index: {}]
  %s9 = inlined_call_operand.vmem [shape: f32[3,256,256], index: 9, kind: input, shape index: {}]
  %s10 = inlined_call_operand.vmem [shape: f32[1,256], index: 10, kind: input, shape index: {}]
  %s11 = inlined_call_operand.vmem [shape: f32[3,128,128], index: 11, kind: input, shape index: {}]
  %s12 = inlined_call_operand.vmem [shape: f32[1,128], index: 12, kind: input, shape index: {}]
  %s13 = inlined_call_operand.vmem [shape: f32[2,16,128], index: 13, kind: output, shape index: {}]
  %s14 = sld [smem:[#allocation0]]
  $region85: #{spade_forward.1} parent=0
    _
  %s16 = ssub.s32 1, %s14
  %s17 = scalar_select 0, %s16, %s14
  loop: start=0, step=1, limit=4
  $region2: #{spade_forward.1} parent=0 // loop_pre_header
    _
  $region3: #{spade_forward.1} parent=0 // loop_header
    %s19 = sphi 0, %s23
    %p20 = scmp.ge.s32.totalorder %s19, 4
    %s29 = sphi 0, %s31
    %s32 = sphi 0, %s29
    %s33 = sphi 0, %s32
    %s49 = sphi 0, %s33
    %s53 = sphi 0, %s53
    %s55 = sphi 0, %s53
    %s56 = sphi 0, %s55
    %s70 = sphi 0, %s56
    %s74 = sphi 0, %s74
    %s76 = sphi 0, %s74
    %s77 = sphi 0, %s76
    %s91 = sphi 0, %s77
    %s95 = sphi 0, %s95
    %s97 = sphi 0, %s95
    %s98 = sphi 0, %s97
    %s112 = sphi 0, %s98
    %s116 = sphi 0, %s116
    %s118 = sphi 0, %s116
    %s119 = sphi 0, %s118
    %s133 = sphi 0, %s119
    %s137 = sphi 0, %s137
    %s139 = sphi 0, %s137
    %s140 = sphi 0, %s139
    %s154 = sphi 0, %s140
    %s158 = sphi 0, %s158
    %s160 = sphi 0, %s158
    %s161 = sphi 0, %s160
    %s175 = sphi 0, %s161
    %s179 = sphi 0, %s179
    %s181 = sphi 0, %s179
    %s182 = sphi 0, %s181
    %s196 = sphi 0, %s182
    %s200 = sphi 0, %s200
    %s202 = sphi 0, %s200
    %s203 = sphi 0, %s202
    %s217 = sphi 0, %s203
    %s221 = sphi 0, %s221
    %s223 = sphi 0, %s221
    %s224 = sphi 0, %s223
    %s238 = sphi 0, %s224
    %s242 = sphi 0, %s242
    %s244 = sphi 0, %s242
    %s245 = sphi 0, %s244
    %s259 = sphi 0, %s245
    %s263 = sphi 0, %s263
    %s265 = sphi 0, %s263
    %s266 = sphi 0, %s265
    %s280 = sphi 0, %s266
    %s284 = sphi 0, %s284
    %s286 = sphi 0, %s284
    %s287 = sphi 0, %s286
    %s301 = sphi 0, %s287
    %s307 = sphi 0, %s309
    %s310 = sphi 0, %s307
    %s311 = sphi 0, %s310
    %s327 = sphi 0, %s311
  $region4: #{spade_forward.1} parent=0 // loop_header_branch
    %22 = sbr.rel (%p20) target = $region8
  $region5: #{spade_forward.1} parent=0 // loop_body
    %s24 = ssub.s32 %s19, 1
    %s25 = ssub.s32 %s19, 2
    %s26 = sadd.s32 %s19, 1
    %s27 = ssub.s32 %s19, %s26
    %p28 = scmp.eq.s32.totalorder %s27, 0
    %s30 = sadd.s32 %s29, 1
    %s31 = scalar_select %p28, %s29, %s30
    %p34 = pneg %p28
    %p35 = scmp.eq.s32.totalorder %s19, 1
    %p36 = por %p34, %p35
    %p37 = scmp.ne.s32.totalorder %s29, %s32
    %p38 = scmp.eq.s32.totalorder %s19, 0
    %p39 = por %p37, %p38
    %p40 = scmp.ne.s32.totalorder %s29, %s32
    %p41 = scmp.eq.s32.totalorder %s24, 1
    %p42 = por %p40, %p41
    %p43 = scmp.ne.s32.totalorder %s32, %s33
    %p44 = scmp.eq.s32.totalorder %s24, 0
    %p45 = por %p43, %p44
    %p46 = scmp.ne.s32.totalorder %s32, %s33
    %p47 = scmp.eq.s32.totalorder %s25, 1
    %p48 = por %p46, %p47
    %p50 = scmp.ne.s32.totalorder %s33, %s49
    %p51 = scmp.eq.s32.totalorder %s25, 0
    %p52 = por %p50, %p51
    %s54 = sadd.s32 %s53, 1
    %p57 = scmp.eq.s32.totalorder %s19, 1
    %p58 = scmp.ne.s32.totalorder %s53, %s55
    %p59 = scmp.eq.s32.totalorder %s19, 0
    %p60 = por %p58, %p59
    %p61 = scmp.ne.s32.totalorder %s53, %s55
    %p62 = scmp.eq.s32.totalorder %s24, 1
    %p63 = por %p61, %p62
    %p64 = scmp.ne.s32.totalorder %s55, %s56
    %p65 = scmp.eq.s32.totalorder %s24, 0
    %p66 = por %p64, %p65
    %p67 = scmp.ne.s32.totalorder %s55, %s56
    %p68 = scmp.eq.s32.totalorder %s25, 1
    %p69 = por %p67, %p68
    %p71 = scmp.ne.s32.totalorder %s56, %s70
    %p72 = scmp.eq.s32.totalorder %s25, 0
    %p73 = por %p71, %p72
    %s75 = sadd.s32 %s74, 1
    %p78 = scmp.eq.s32.totalorder %s19, 1
    %p79 = scmp.ne.s32.totalorder %s74, %s76
    %p80 = scmp.eq.s32.totalorder %s19, 0
    %p81 = por %p79, %p80
    %p82 = scmp.ne.s32.totalorder %s74, %s76
    %p83 = scmp.eq.s32.totalorder %s24, 1
    %p84 = por %p82, %p83
    %p85 = scmp.ne.s32.totalorder %s76, %s77
    %p86 = scmp.eq.s32.totalorder %s24, 0
    %p87 = por %p85, %p86
    %p88 = scmp.ne.s32.totalorder %s76, %s77
    %p89 = scmp.eq.s32.totalorder %s25, 1
    %p90 = por %p88, %p89
    %p92 = scmp.ne.s32.totalorder %s77, %s91
    %p93 = scmp.eq.s32.totalorder %s25, 0
    %p94 = por %p92, %p93
    %s96 = sadd.s32 %s95, 1
    %p99 = scmp.eq.s32.totalorder %s19, 1
    %p100 = scmp.ne.s32.totalorder %s95, %s97
    %p101 = scmp.eq.s32.totalorder %s19, 0
    %p102 = por %p100, %p101
    %p103 = scmp.ne.s32.totalorder %s95, %s97
    %p104 = scmp.eq.s32.totalorder %s24, 1
    %p105 = por %p103, %p104
    %p106 = scmp.ne.s32.totalorder %s97, %s98
    %p107 = scmp.eq.s32.totalorder %s24, 0
    %p108 = por %p106, %p107
    %p109 = scmp.ne.s32.totalorder %s97, %s98
    %p110 = scmp.eq.s32.totalorder %s25, 1
    %p111 = por %p109, %p110
    %p113 = scmp.ne.s32.totalorder %s98, %s112
    %p114 = scmp.eq.s32.totalorder %s25, 0
    %p115 = por %p113, %p114
    %s117 = sadd.s32 %s116, 1
    %p120 = scmp.eq.s32.totalorder %s19, 1
    %p121 = scmp.ne.s32.totalorder %s116, %s118
    %p122 = scmp.eq.s32.totalorder %s19, 0
    %p123 = por %p121, %p122
    %p124 = scmp.ne.s32.totalorder %s116, %s118
    %p125 = scmp.eq.s32.totalorder %s24, 1
    %p126 = por %p124, %p125
    %p127 = scmp.ne.s32.totalorder %s118, %s119
    %p128 = scmp.eq.s32.totalorder %s24, 0
    %p129 = por %p127, %p128
    %p130 = scmp.ne.s32.totalorder %s118, %s119
    %p131 = scmp.eq.s32.totalorder %s25, 1
    %p132 = por %p130, %p131
    %p134 = scmp.ne.s32.totalorder %s119, %s133
    %p135 = scmp.eq.s32.totalorder %s25, 0
    %p136 = por %p134, %p135
    %s138 = sadd.s32 %s137, 1
    %p141 = scmp.eq.s32.totalorder %s19, 1
    %p142 = scmp.ne.s32.totalorder %s137, %s139
    %p143 = scmp.eq.s32.totalorder %s19, 0
    %p144 = por %p142, %p143
    %p145 = scmp.ne.s32.totalorder %s137, %s139
    %p146 = scmp.eq.s32.totalorder %s24, 1
    %p147 = por %p145, %p146
    %p148 = scmp.ne.s32.totalorder %s139, %s140
    %p149 = scmp.eq.s32.totalorder %s24, 0
    %p150 = por %p148, %p149
    %p151 = scmp.ne.s32.totalorder %s139, %s140
    %p152 = scmp.eq.s32.totalorder %s25, 1
    %p153 = por %p151, %p152
    %p155 = scmp.ne.s32.totalorder %s140, %s154
    %p156 = scmp.eq.s32.totalorder %s25, 0
    %p157 = por %p155, %p156
    %s159 = sadd.s32 %s158, 1
    %p162 = scmp.eq.s32.totalorder %s19, 1
    %p163 = scmp.ne.s32.totalorder %s158, %s160
    %p164 = scmp.eq.s32.totalorder %s19, 0
    %p165 = por %p163, %p164
    %p166 = scmp.ne.s32.totalorder %s158, %s160
    %p167 = scmp.eq.s32.totalorder %s24, 1
    %p168 = por %p166, %p167
    %p169 = scmp.ne.s32.totalorder %s160, %s161
    %p170 = scmp.eq.s32.totalorder %s24, 0
    %p171 = por %p169, %p170
    %p172 = scmp.ne.s32.totalorder %s160, %s161
    %p173 = scmp.eq.s32.totalorder %s25, 1
    %p174 = por %p172, %p173
    %p176 = scmp.ne.s32.totalorder %s161, %s175
    %p177 = scmp.eq.s32.totalorder %s25, 0
    %p178 = por %p176, %p177
    %s180 = sadd.s32 %s179, 1
    %p183 = scmp.eq.s32.totalorder %s19, 1
    %p184 = scmp.ne.s32.totalorder %s179, %s181
    %p185 = scmp.eq.s32.totalorder %s19, 0
    %p186 = por %p184, %p185
    %p187 = scmp.ne.s32.totalorder %s179, %s181
    %p188 = scmp.eq.s32.totalorder %s24, 1
    %p189 = por %p187, %p188
    %p190 = scmp.ne.s32.totalorder %s181, %s182
    %p191 = scmp.eq.s32.totalorder %s24, 0
    %p192 = por %p190, %p191
    %p193 = scmp.ne.s32.totalorder %s181, %s182
    %p194 = scmp.eq.s32.totalorder %s25, 1
    %p195 = por %p193, %p194
    %p197 = scmp.ne.s32.totalorder %s182, %s196
    %p198 = scmp.eq.s32.totalorder %s25, 0
    %p199 = por %p197, %p198
    %s201 = sadd.s32 %s200, 1
    %p204 = scmp.eq.s32.totalorder %s19, 1
    %p205 = scmp.ne.s32.totalorder %s200, %s202
    %p206 = scmp.eq.s32.totalorder %s19, 0
    %p207 = por %p205, %p206
    %p208 = scmp.ne.s32.totalorder %s200, %s202
    %p209 = scmp.eq.s32.totalorder %s24, 1
    %p210 = por %p208, %p209
    %p211 = scmp.ne.s32.totalorder %s202, %s203
    %p212 = scmp.eq.s32.totalorder %s24, 0
    %p213 = por %p211, %p212
    %p214 = scmp.ne.s32.totalorder %s202, %s203
    %p215 = scmp.eq.s32.totalorder %s25, 1
    %p216 = por %p214, %p215
    %p218 = scmp.ne.s32.totalorder %s203, %s217
    %p219 = scmp.eq.s32.totalorder %s25, 0
    %p220 = por %p218, %p219
    %s222 = sadd.s32 %s221, 1
    %p225 = scmp.eq.s32.totalorder %s19, 1
    %p226 = scmp.ne.s32.totalorder %s221, %s223
    %p227 = scmp.eq.s32.totalorder %s19, 0
    %p228 = por %p226, %p227
    %p229 = scmp.ne.s32.totalorder %s221, %s223
    %p230 = scmp.eq.s32.totalorder %s24, 1
    %p231 = por %p229, %p230
    %p232 = scmp.ne.s32.totalorder %s223, %s224
    %p233 = scmp.eq.s32.totalorder %s24, 0
    %p234 = por %p232, %p233
    %p235 = scmp.ne.s32.totalorder %s223, %s224
    %p236 = scmp.eq.s32.totalorder %s25, 1
    %p237 = por %p235, %p236
    %p239 = scmp.ne.s32.totalorder %s224, %s238
    %p240 = scmp.eq.s32.totalorder %s25, 0
    %p241 = por %p239, %p240
    %s243 = sadd.s32 %s242, 1
    %p246 = scmp.eq.s32.totalorder %s19, 1
    %p247 = scmp.ne.s32.totalorder %s242, %s244
    %p248 = scmp.eq.s32.totalorder %s19, 0
    %p249 = por %p247, %p248
    %p250 = scmp.ne.s32.totalorder %s242, %s244
    %p251 = scmp.eq.s32.totalorder %s24, 1
    %p252 = por %p250, %p251
    %p253 = scmp.ne.s32.totalorder %s244, %s245
    %p254 = scmp.eq.s32.totalorder %s24, 0
    %p255 = por %p253, %p254
    %p256 = scmp.ne.s32.totalorder %s244, %s245
    %p257 = scmp.eq.s32.totalorder %s25, 1
    %p258 = por %p256, %p257
    %p260 = scmp.ne.s32.totalorder %s245, %s259
    %p261 = scmp.eq.s32.totalorder %s25, 0
    %p262 = por %p260, %p261
    %s264 = sadd.s32 %s263, 1
    %p267 = scmp.eq.s32.totalorder %s19, 1
    %p268 = scmp.ne.s32.totalorder %s263, %s265
    %p269 = scmp.eq.s32.totalorder %s19, 0
    %p270 = por %p268, %p269
    %p271 = scmp.ne.s32.totalorder %s263, %s265
    %p272 = scmp.eq.s32.totalorder %s24, 1
    %p273 = por %p271, %p272
    %p274 = scmp.ne.s32.totalorder %s265, %s266
    %p275 = scmp.eq.s32.totalorder %s24, 0
    %p276 = por %p274, %p275
    %p277 = scmp.ne.s32.totalorder %s265, %s266
    %p278 = scmp.eq.s32.totalorder %s25, 1
    %p279 = por %p277, %p278
    %p281 = scmp.ne.s32.totalorder %s266, %s280
    %p282 = scmp.eq.s32.totalorder %s25, 0
    %p283 = por %p281, %p282
    %s285 = sadd.s32 %s284, 1
    %p288 = scmp.eq.s32.totalorder %s19, 1
    %p289 = scmp.ne.s32.totalorder %s284, %s286
    %p290 = scmp.eq.s32.totalorder %s19, 0
    %p291 = por %p289, %p290
    %p292 = scmp.ne.s32.totalorder %s284, %s286
    %p293 = scmp.eq.s32.totalorder %s24, 1
    %p294 = por %p292, %p293
    %p295 = scmp.ne.s32.totalorder %s286, %s287
    %p296 = scmp.eq.s32.totalorder %s24, 0
    %p297 = por %p295, %p296
    %p298 = scmp.ne.s32.totalorder %s286, %s287
    %p299 = scmp.eq.s32.totalorder %s25, 1
    %p300 = por %p298, %p299
    %p302 = scmp.ne.s32.totalorder %s287, %s301
    %p303 = scmp.eq.s32.totalorder %s25, 0
    %p304 = por %p302, %p303
    %s305 = ssub.s32 %s19, %s26
    %p306 = scmp.eq.s32.totalorder %s305, 0
    %s308 = sadd.s32 %s307, 1
    %s309 = scalar_select %p306, %s307, %s308
    %p312 = pneg %p306
    %p313 = scmp.eq.s32.totalorder %s19, 1
    %p314 = por %p312, %p313
    %p315 = scmp.ne.s32.totalorder %s307, %s310
    %p316 = scmp.eq.s32.totalorder %s19, 0
    %p317 = por %p315, %p316
    %p318 = scmp.ne.s32.totalorder %s307, %s310
    %p319 = scmp.eq.s32.totalorder %s24, 1
    %p320 = por %p318, %p319
    %p321 = scmp.ne.s32.totalorder %s310, %s311
    %p322 = scmp.eq.s32.totalorder %s24, 0
    %p323 = por %p321, %p322
    %p324 = scmp.ne.s32.totalorder %s310, %s311
    %p325 = scmp.eq.s32.totalorder %s25, 1
    %p326 = por %p324, %p325
    %p328 = scmp.ne.s32.totalorder %s311, %s327
    %p329 = scmp.eq.s32.totalorder %s25, 0
    %p330 = por %p328, %p329
    %p331 = scmp.le.s32.totalorder 1, %s19
    %p332 = scmp.lt.s32.totalorder %s19, 3
    %p333 = pnand %p331, %p332
    %p334 = pneg %p333
    // Predicated region
    $region9: #{spade_forward.1} parent=5 // pred_check
      _
    $region10: #{spade_forward.1} parent=5 // pred_check_branch
      %336 = sbr.rel (%p333) target = $region12
    $region11: #{spade_forward.1} parent=5 // pred_region
      %s337 = ssub.s32 %s19, 1
      // Predicated region
      $region13: #{spade_forward.1} parent=11 // pred_check
        %p338 = pneg %p66
      $region14: #{spade_forward.1} parent=11 // pred_check_branch
        %340 = sbr.rel (%p338) target = $region16
      $region15: #{spade_forward.1} parent=11 // pred_region
        _
      $region16: #{spade_forward.1} parent=11 // pred_fallthru
        _
      // Predicated region
      $region17: #{spade_forward.1} parent=11 // pred_check
        %p341 = pneg %p87
      $region18: #{spade_forward.1} parent=11 // pred_check_branch
        %343 = sbr.rel (%p341) target = $region20
      $region19: #{spade_forward.1} parent=11 // pred_region
        _
      $region20: #{spade_forward.1} parent=11 // pred_fallthru
        _
      // Predicated region
      $region21: #{spade_forward.1} parent=11 // pred_check
        %p344 = pneg %p108
      $region22: #{spade_forward.1} parent=11 // pred_check_branch
        %346 = sbr.rel (%p344) target = $region24
      $region23: #{spade_forward.1} parent=11 // pred_region
        _
      $region24: #{spade_forward.1} parent=11 // pred_fallthru
        _
      // Predicated region
      $region25: #{spade_forward.1} parent=11 // pred_check
        %p347 = pneg %p129
      $region26: #{spade_forward.1} parent=11 // pred_check_branch
        %349 = sbr.rel (%p347) target = $region28
      $region27: #{spade_forward.1} parent=11 // pred_region
        _
      $region28: #{spade_forward.1} parent=11 // pred_fallthru
        _
      // Predicated region
      $region29: #{spade_forward.1} parent=11 // pred_check
        %p350 = pneg %p150
      $region30: #{spade_forward.1} parent=11 // pred_check_branch
        %352 = sbr.rel (%p350) target = $region32
      $region31: #{spade_forward.1} parent=11 // pred_region
        _
      $region32: #{spade_forward.1} parent=11 // pred_fallthru
        _
      // Predicated region
      $region33: #{spade_forward.1} parent=11 // pred_check
        %p353 = pneg %p171
      $region34: #{spade_forward.1} parent=11 // pred_check_branch
        %355 = sbr.rel (%p353) target = $region36
      $region35: #{spade_forward.1} parent=11 // pred_region
        _
      $region36: #{spade_forward.1} parent=11 // pred_fallthru
        _
      // Predicated region
      $region37: #{spade_forward.1} parent=11 // pred_check
        %p356 = pneg %p192
      $region38: #{spade_forward.1} parent=11 // pred_check_branch
        %358 = sbr.rel (%p356) target = $region40
      $region39: #{spade_forward.1} parent=11 // pred_region
        _
      $region40: #{spade_forward.1} parent=11 // pred_fallthru
        _
      // Predicated region
      $region41: #{spade_forward.1} parent=11 // pred_check
        %p359 = pneg %p213
      $region42: #{spade_forward.1} parent=11 // pred_check_branch
        %361 = sbr.rel (%p359) target = $region44
      $region43: #{spade_forward.1} parent=11 // pred_region
        _
      $region44: #{spade_forward.1} parent=11 // pred_fallthru
        _
      // Predicated region
      $region45: #{spade_forward.1} parent=11 // pred_check
        %p362 = pneg %p234
      $region46: #{spade_forward.1} parent=11 // pred_check_branch
        %364 = sbr.rel (%p362) target = $region48
      $region47: #{spade_forward.1} parent=11 // pred_region
        _
      $region48: #{spade_forward.1} parent=11 // pred_fallthru
        _
      // Predicated region
      $region49: #{spade_forward.1} parent=11 // pred_check
        %p365 = pneg %p255
      $region50: #{spade_forward.1} parent=11 // pred_check_branch
        %367 = sbr.rel (%p365) target = $region52
      $region51: #{spade_forward.1} parent=11 // pred_region
        _
      $region52: #{spade_forward.1} parent=11 // pred_fallthru
        _
      // Predicated region
      $region53: #{spade_forward.1} parent=11 // pred_check
        %p368 = pneg %p276
      $region54: #{spade_forward.1} parent=11 // pred_check_branch
        %370 = sbr.rel (%p368) target = $region56
      $region55: #{spade_forward.1} parent=11 // pred_region
        _
      $region56: #{spade_forward.1} parent=11 // pred_fallthru
        _
      // Predicated region
      $region57: #{spade_forward.1} parent=11 // pred_check
        %p371 = pneg %p297
      $region58: #{spade_forward.1} parent=11 // pred_check_branch
        %373 = sbr.rel (%p371) target = $region60
      $region59: #{spade_forward.1} parent=11 // pred_region
        _
      $region60: #{spade_forward.1} parent=11 // pred_fallthru
        _
    $region12: #{spade_forward.1} parent=5 // pred_fallthru
      _
    %p374 = scmp.lt.s32.totalorder %s19, 2
    // Predicated region
    $region61: #{spade_forward.1} parent=5 // pred_check
      %p375 = pneg %p374
    $region62: #{spade_forward.1} parent=5 // pred_check_branch
      %377 = sbr.rel (%p375) target = $region64
    $region63: #{spade_forward.1} parent=5 // pred_region
      // Predicated region
      $region65: #{spade_forward.1} parent=63 // pred_check
        %p378 = pneg %p39
      $region66: #{spade_forward.1} parent=63 // pred_check_branch
        %380 = sbr.rel (%p378) target = $region68
      $region67: #{spade_forward.1} parent=63 // pred_region
        %p381 = scmp.lt.s32.totalorder %s19, 1
        %s382 = scalar_select %p381, %s19, 1
        %s383 = smul.addr %s382, 2
        %s384 = smul.addr %s383, 8
        %s385 = scalar_lea.vmem %s0, %s384
      $region68: #{spade_forward.1} parent=63 // pred_fallthru
        _
    $region64: #{spade_forward.1} parent=5 // pred_fallthru
      _
    %p386 = scmp.le.s32.totalorder 1, %s19
    %p387 = scmp.lt.s32.totalorder %s19, 3
    %p388 = pnand %p386, %p387
    %p389 = pneg %p388
    // Predicated region
    $region69: #{spade_forward.1} parent=5 // pred_check
      _
    $region70: #{spade_forward.1} parent=5 // pred_check_branch
      %391 = sbr.rel (%p388) target = $region72
    $region71: #{spade_forward.1} parent=5 // pred_region
      %s392 = ssub.s32 %s19, 1
      %p393 = scmp.lt.s32.totalorder %s24, 1
      %s394 = scalar_select %p393, %s24, 1
      %s395 = smul.addr %s394, 2
      %s396 = smul.addr %s395, 8
      %s397 = scalar_lea.vmem %s0, %s396
      %p398 = pneg %p45
      %p399 = pneg %p42
      %p400 = pneg %p66
      %p401 = pneg %p63
      %p402 = pneg %p87
      %p403 = pneg %p84
      %p404 = pneg %p108
      %p405 = pneg %p105
      %p406 = pneg %p129
      %p407 = pneg %p126
      %p408 = pneg %p150
      %p409 = pneg %p147
      %p410 = pneg %p171
      %p411 = pneg %p168
      %p412 = pneg %p192
      %p413 = pneg %p189
      %p414 = pneg %p213
      %p415 = pneg %p210
      %p416 = pneg %p234
      %p417 = pneg %p231
      %p418 = pneg %p255
      %p419 = pneg %p252
      %p420 = pneg %p276
      %p421 = pneg %p273
      %p422 = pneg %p297
      %p423 = pneg %p294
      %p424 = pneg %p323
      %p425 = pneg %p320
      %p426 = scmp.lt.s32.totalorder %s24, 1
      %s427 = scalar_select %p426, %s24, 1
      %s428 = smul.addr %s427, 2
      %s429 = smul.addr %s428, 8
      %s430 = scalar_lea.vmem %s13, %s429
      %p431 = scmp.lt.s32.totalorder %s24, 1
      %s432 = scalar_select %p431, %s24, 1
      %s433 = smul.addr %s432, 2
      %s434 = smul.addr %s433, 8
      %s435 = scalar_lea.vmem %s0, %s434
      %p436 = scmp.lt.s32.totalorder %s24, 1
      %s437 = scalar_select %p436, %s24, 1
      %s438 = smul.addr %s437, 2
      %s439 = smul.addr %s438, 8
      %s440 = scalar_lea.vmem %s13, %s439
      %v441 = vld [vmem:[%s435] sm:$0xff]
      %v442 = vld [vmem:[%s435 + $0x8] sm:$0xff]
      %v443 = vld [vmem:[%s1] sm:$0xff]
      %v444 = vld [vmem:[%s1 + $0x8] sm:$0xff]
      %v445 = vld [vmem:[%s2] sm:$0xff]
      %v446 = vld [vmem:[%s2 + $0x8] sm:$0xff]
      %vm447 = vcmask 130048
      %v449 = vsel %vm447, %v443, 0
      %v452 = vsel %vm447, %v444, 0
      %454 = vmatpush.msra.mxu0 0.0
      %455 = vmatpush.msra.mxu0 0.0
      %456 = vmatpush.msra.mxu0 0.0
      %457 = vmatpush.msra.mxu0 0.0
      %458 = vmatpush.msra.mxu0 0.0
      %459 = vmatpush.msra.mxu0 0.0
      %460 = vmatpush.msra.mxu0 0.0
      %461 = vmatpush.msra.mxu0 0.0
      %462 = vmatpush.msra.mxu0 0.0
      %463 = vmatpush.msra.mxu0 0.0
      %464 = vmatpush.msra.mxu0 0.0
      %465 = vmatpush.msra.mxu0 0.0
      %466 = vmatpush.msra.mxu0 0.0
      %467 = vmatpush.msra.mxu0 0.0
      %468 = vmatpush.msra.mxu0 %v442
      %469 = vmatpush.msra.mxu0 %v441
      %470 = vmatmul.f32.gmra.mxu0 %v449
      %v471 = vpop.f32.mrf.mxu0
      %v472 = vadd.f32 0.0, %v471
      %473 = vmatmul.f32.gmra.mxu0 %v452
      %v474 = vpop.f32.mrf.mxu0
      %v475 = vadd.f32 0.0, %v474
      %476 = vdwg.mxu0
      %v478 = vsel %vm447, %v445, 0
      %v481 = vsel %vm447, %v446, 0
      %483 = vmatpush.msra.mxu0 0.0
      %484 = vmatpush.msra.mxu0 0.0
      %485 = vmatpush.msra.mxu0 0.0
      %486 = vmatpush.msra.mxu0 0.0
      %487 = vmatpush.msra.mxu0 0.0
      %488 = vmatpush.msra.mxu0 0.0
      %489 = vmatpush.msra.mxu0 0.0
      %490 = vmatpush.msra.mxu0 0.0
      %491 = vmatpush.msra.mxu0 0.0
      %492 = vmatpush.msra.mxu0 0.0
      %493 = vmatpush.msra.mxu0 0.0
      %494 = vmatpush.msra.mxu0 0.0
      %495 = vmatpush.msra.mxu0 0.0
      %496 = vmatpush.msra.mxu0 0.0
      %497 = vmatpush.msra.mxu0 %v442
      %498 = vmatpush.msra.mxu0 %v441
      %499 = vmatmul.f32.gmra.mxu0 %v478
      %v500 = vpop.f32.mrf.mxu0
      %v501 = vadd.f32 0.0, %v500
      %502 = vmatmul.f32.gmra.mxu0 %v481
      %v503 = vpop.f32.mrf.mxu0
      %v504 = vadd.f32 0.0, %v503
      %505 = vdwg.mxu0
      %v506 = vadd.f32 %v441, %v472
      %v507 = vadd.f32 %v442, %v475
      %v508 = vadd.f32 %v506, %v501
      %v509 = vadd.f32 %v507, %v504
      %v510 = vld [vmem:[%s3] sm:$0xff]
      %v511 = vld [vmem:[%s3 + $0x8] sm:$0xff]
      %v512 = vld [vmem:[%s3 + $0x10] sm:$0xff]
      %v513 = vld [vmem:[%s3 + $0x18] sm:$0xff]
      %v514 = vld [vmem:[%s3 + $0x20] sm:$0xff]
      %v515 = vld [vmem:[%s3 + $0x28] sm:$0xff]
      %v516 = vld [vmem:[%s3 + $0x30] sm:$0xff]
      %v517 = vld [vmem:[%s3 + $0x38] sm:$0xff]
      %v518 = vld [vmem:[%s3 + $0x40] sm:$0xff]
      %v519 = vld [vmem:[%s3 + $0x48] sm:$0xff]
      %v520 = vld [vmem:[%s3 + $0x50] sm:$0xff]
      %v521 = vld [vmem:[%s3 + $0x58] sm:$0xff]
      %v522 = vld [vmem:[%s3 + $0x60] sm:$0xff]
      %v523 = vld [vmem:[%s3 + $0x68] sm:$0xff]
      %v524 = vld [vmem:[%s3 + $0x70] sm:$0xff]
      %v525 = vld [vmem:[%s3 + $0x78] sm:$0xff]
      %526 = vmatpush.msra.mxu0 %v525
      %527 = vmatpush.msra.mxu0 %v524
      %528 = vmatpush.msra.mxu0 %v523
      %529 = vmatpush.msra.mxu0 %v522
      %530 = vmatpush.msra.mxu0 %v521
      %531 = vmatpush.msra.mxu0 %v520
      %532 = vmatpush.msra.mxu0 %v519
      %533 = vmatpush.msra.mxu0 %v518
      %534 = vmatpush.msra.mxu0 %v517
      %535 = vmatpush.msra.mxu0 %v516
      %536 = vmatpush.msra.mxu0 %v515
      %537 = vmatpush.msra.mxu0 %v514
      %538 = vmatpush.msra.mxu0 %v513
      %539 = vmatpush.msra.mxu0 %v512
      %540 = vmatpush.msra.mxu0 %v511
      %541 = vmatpush.msra.mxu0 %v510
      %542 = vmatmul.f32.gmra.mxu0 %v508
      %v543 = vpop.f32.mrf.mxu0
      %v544 = vadd.f32 0.0, %v543
      %545 = vmatmul.f32.gmra.mxu0 %v509
      %v546 = vpop.f32.mrf.mxu0
      %v547 = vadd.f32 0.0, %v546
      %548 = vdwg.mxu0
      %v549 = vsub.f32 %v441, %v544
      %v550 = vsub.f32 %v442, %v547
      %v551 = vmul.f32 %v549, %v549
      %v552 = vmul.f32 %v550, %v550
      %553 = vmatpush.msra.mxu0 0.0
      %554 = vmatpush.msra.mxu0 0.0
      %555 = vmatpush.msra.mxu0 0.0
      %556 = vmatpush.msra.mxu0 0.0
      %557 = vmatpush.msra.mxu0 0.0
      %558 = vmatpush.msra.mxu0 0.0
      %559 = vmatpush.msra.mxu0 0.0
      %560 = vmatpush.msra.mxu0 0.0
      %561 = vmatpush.msra.mxu0 0.0
      %562 = vmatpush.msra.mxu0 0.0
      %563 = vmatpush.msra.mxu0 0.0
      %564 = vmatpush.msra.mxu0 0.0
      %565 = vmatpush.msra.mxu0 0.0
      %566 = vmatpush.msra.mxu0 0.0
      %567 = vmatpush.msra.mxu0 %v552
      %568 = vmatpush.msra.mxu0 %v551
      %569 = vmatmul.f32.gmra.mxu0 %v449
      %v570 = vpop.f32.mrf.mxu0
      %v571 = vadd.f32 0.0, %v570
      %572 = vmatmul.f32.gmra.mxu0 %v452
      %v573 = vpop.f32.mrf.mxu0
      %v574 = vadd.f32 0.0, %v573
      %575 = vdwg.mxu0
      %576 = vmatpush.msra.mxu0 0.0
      %577 = vmatpush.msra.mxu0 0.0
      %578 = vmatpush.msra.mxu0 0.0
      %579 = vmatpush.msra.mxu0 0.0
      %580 = vmatpush.msra.mxu0 0.0
      %581 = vmatpush.msra.mxu0 0.0
      %582 = vmatpush.msra.mxu0 0.0
      %583 = vmatpush.msra.mxu0 0.0
      %584 = vmatpush.msra.mxu0 0.0
      %585 = vmatpush.msra.mxu0 0.0
      %586 = vmatpush.msra.mxu0 0.0
      %587 = vmatpush.msra.mxu0 0.0
      %588 = vmatpush.msra.mxu0 0.0
      %589 = vmatpush.msra.mxu0 0.0
      %590 = vmatpush.msra.mxu0 %v552
      %591 = vmatpush.msra.mxu0 %v551
      %592 = vmatmul.f32.gmra.mxu0 %v478
      %v593 = vpop.f32.mrf.mxu0
      %v594 = vadd.f32 0.0, %v593
      %595 = vmatmul.f32.gmra.mxu0 %v481
      %v596 = vpop.f32.mrf.mxu0
      %v597 = vadd.f32 0.0, %v596
      %598 = vdwg.mxu0
      %v599 = vadd.f32 %v551, %v571
      %v600 = vadd.f32 %v552, %v574
      %v601 = vadd.f32 %v599, %v594
      %v602 = vadd.f32 %v600, %v597
      %603 = vmatpush.msra.mxu0 %v525
      %604 = vmatpush.msra.mxu0 %v524
      %605 = vmatpush.msra.mxu0 %v523
      %606 = vmatpush.msra.mxu0 %v522
      %607 = vmatpush.msra.mxu0 %v521
      %608 = vmatpush.msra.mxu0 %v520
      %609 = vmatpush.msra.mxu0 %v519
      %610 = vmatpush.msra.mxu0 %v518
      %611 = vmatpush.msra.mxu0 %v517
      %612 = vmatpush.msra.mxu0 %v516
      %613 = vmatpush.msra.mxu0 %v515
      %614 = vmatpush.msra.mxu0 %v514
      %615 = vmatpush.msra.mxu0 %v513
      %616 = vmatpush.msra.mxu0 %v512
      %617 = vmatpush.msra.mxu0 %v511
      %618 = vmatpush.msra.mxu0 %v510
      %619 = vmatmul.f32.gmra.mxu0 %v601
      %v620 = vpop.f32.mrf.mxu0
      %v621 = vadd.f32 0.0, %v620
      %622 = vmatmul.f32.gmra.mxu0 %v602
      %v623 = vpop.f32.mrf.mxu0
      %v624 = vadd.f32 0.0, %v623
      %625 = vdwg.mxu0
      %v626 = vld [vmem:[%s4] sm:$0xff]
      %v627 = vld [vmem:[%s4 + $0x8] sm:$0xff]
      %v628 = vld [vmem:[%s4 + $0x10] sm:$0xff]
      %v629 = vld [vmem:[%s4 + $0x18] sm:$0xff]
      %v630 = vld [vmem:[%s4 + $0x20] sm:$0xff]
      %v631 = vld [vmem:[%s4 + $0x28] sm:$0xff]
      %v632 = vld [vmem:[%s4 + $0x30] sm:$0xff]
      %v633 = vld [vmem:[%s4 + $0x38] sm:$0xff]
      %v634 = vld [vmem:[%s4 + $0x40] sm:$0xff]
      %v635 = vld [vmem:[%s4 + $0x48] sm:$0xff]
      %v636 = vld [vmem:[%s4 + $0x50] sm:$0xff]
      %v637 = vld [vmem:[%s4 + $0x58] sm:$0xff]
      %v638 = vld [vmem:[%s4 + $0x60] sm:$0xff]
      %v639 = vld [vmem:[%s4 + $0x68] sm:$0xff]
      %v640 = vld [vmem:[%s4 + $0x70] sm:$0xff]
      %v641 = vld [vmem:[%s4 + $0x78] sm:$0xff]
      %642 = vmatpush.msra.mxu0 %v641
      %643 = vmatpush.msra.mxu0 %v640
      %644 = vmatpush.msra.mxu0 %v639
      %645 = vmatpush.msra.mxu0 %v638
      %646 = vmatpush.msra.mxu0 %v637
      %647 = vmatpush.msra.mxu0 %v636
      %648 = vmatpush.msra.mxu0 %v635
      %649 = vmatpush.msra.mxu0 %v634
      %650 = vmatpush.msra.mxu0 %v633
      %651 = vmatpush.msra.mxu0 %v632
      %652 = vmatpush.msra.mxu0 %v631
      %653 = vmatpush.msra.mxu0 %v630
      %654 = vmatpush.msra.mxu0 %v629
      %655 = vmatpush.msra.mxu0 %v628
      %656 = vmatpush.msra.mxu0 %v627
      %657 = vmatpush.msra.mxu0 %v626
      %658 = vmatmul.f32.gmra.mxu0 %v621
      %v659 = vpop.f32.mrf.mxu0
      %v660 = vadd.f32 0.0, %v659
      %661 = vmatmul.f32.gmra.mxu0 %v624
      %v662 = vpop.f32.mrf.mxu0
      %v663 = vadd.f32 0.0, %v662
      %664 = vdwg.mxu0
      %v665 = vsub.f32 0.0, %v660
      %v666 = vsub.f32 0.0, %v663
      %v667 = vmul.f32 %v665, 1.442695
      %v668 = vpow.pop %v667
      %v669 = vmul.f32 %v666, 1.442695
      %v670 = vpow.pop %v669
      %v671 = vadd.f32 %v668, 1.0
      %v672 = vadd.f32 %v670, 1.0
      %v673 = vrcp.pop %v671
      %v674 = vmul.f32 %v671, %v673
      %v675 = vsub.f32 1.0, %v674
      %v676 = vmul.f32 %v673, %v675
      %v677 = vadd.f32 %v673, %v676
      %vm678 = vweird.f32 %v671
      %vm679 = vweird.f32 %v673
      %vm680 = vmor %vm678, %vm679
      %v681 = vsel %vm680, %v673, %v677
      %v682 = vand.u32 2147483647, %v671
      %vm683 = vcmp.eq.f32.partialorder %v682, 8.507059e+37
      %v684 = vand.u32 %v671, 2147483648
      %v685 = vor.u32 1.1754944e-38, %v684
      %v686 = vsel %vm683, %v685, %v681
      %v687 = vmul.f32 1.0, %v686
      %v688 = vrcp.pop %v672
      %v689 = vmul.f32 %v672, %v688
      %v690 = vsub.f32 1.0, %v689
      %v691 = vmul.f32 %v688, %v690
      %v692 = vadd.f32 %v688, %v691
      %vm693 = vweird.f32 %v672
      %vm694 = vweird.f32 %v688
      %vm695 = vmor %vm693, %vm694
      %v696 = vsel %vm695, %v688, %v692
      %v697 = vand.u32 2147483647, %v672
      %vm698 = vcmp.eq.f32.partialorder %v697, 8.507059e+37
      %v699 = vand.u32 %v672, 2147483648
      %v700 = vor.u32 1.1754944e-38, %v699
      %v701 = vsel %vm698, %v700, %v696
      %v702 = vmul.f32 1.0, %v701
      %v703 = vmul.f32 %v687, %v441
      %v704 = vmul.f32 %v702, %v442
      %v705 = vadd.f32 %v441, %v442
      %v706 = vrot.slane %v705, 4
      %v707 = vadd.f32 %v705, %v706
      %v708 = vrot.slane %v707, 2
      %v709 = vadd.f32 %v707, %v708
      %v710 = vrot.slane %v709, 1
      %v711 = vadd.f32 %v709, %v710
      %v712 = vld [vmem:[%s5] sm:$0xff]
      %v713 = vld [vmem:[%s5 + $0x8] sm:$0xff]
      %v714 = vld [vmem:[%s5 + $0x10] sm:$0xff]
      %v715 = vld [vmem:[%s5 + $0x18] sm:$0xff]
      %v716 = vld [vmem:[%s5 + $0x20] sm:$0xff]
      %v717 = vld [vmem:[%s5 + $0x28] sm:$0xff]
      %v718 = vld [vmem:[%s5 + $0x30] sm:$0xff]
      %v719 = vld [vmem:[%s5 + $0x38] sm:$0xff]
      %v720 = vld [vmem:[%s5 + $0x40] sm:$0xff]
      %v721 = vld [vmem:[%s5 + $0x48] sm:$0xff]
      %v722 = vld [vmem:[%s5 + $0x50] sm:$0xff]
      %v723 = vld [vmem:[%s5 + $0x58] sm:$0xff]
      %v724 = vld [vmem:[%s5 + $0x60] sm:$0xff]
      %v725 = vld [vmem:[%s5 + $0x68] sm:$0xff]
      %v726 = vld [vmem:[%s5 + $0x70] sm:$0xff]
      %v727 = vld [vmem:[%s5 + $0x78] sm:$0xff]
      %728 = vmatpush.msra.mxu0 %v727
      %729 = vmatpush.msra.mxu0 %v726
      %730 = vmatpush.msra.mxu0 %v725
      %731 = vmatpush.msra.mxu0 %v724
      %732 = vmatpush.msra.mxu0 %v723
      %733 = vmatpush.msra.mxu0 %v722
      %734 = vmatpush.msra.mxu0 %v721
      %735 = vmatpush.msra.mxu0 %v720
      %736 = vmatpush.msra.mxu0 %v719
      %737 = vmatpush.msra.mxu0 %v718
      %738 = vmatpush.msra.mxu0 %v717
      %739 = vmatpush.msra.mxu0 %v716
      %740 = vmatpush.msra.mxu0 %v715
      %741 = vmatpush.msra.mxu0 %v714
      %742 = vmatpush.msra.mxu0 %v713
      %743 = vmatpush.msra.mxu0 %v712
      %744 = vmatmul.f32.gmra.mxu0 %v711
      %v745 = vpop.f32.mrf.mxu0
      %v746 = vadd.f32 0.0, %v745
      %747 = vdwg.mxu0
      %v748 = vperm.slane %v746, 0
      %v749 = vsub.f32 %v441, %v748
      %v750 = vsub.f32 %v442, %v748
      %v751 = vmul.f32 %v749, %v749
      %v752 = vmul.f32 %v750, %v750
      %v753 = vadd.f32 %v751, %v752
      %v754 = vrot.slane %v753, 4
      %v755 = vadd.f32 %v753, %v754
      %v756 = vrot.slane %v755, 2
      %v757 = vadd.f32 %v755, %v756
      %v758 = vrot.slane %v757, 1
      %v759 = vadd.f32 %v757, %v758
      %760 = vmatpush.msra.mxu0 %v727
      %761 = vmatpush.msra.mxu0 %v726
      %762 = vmatpush.msra.mxu0 %v725
      %763 = vmatpush.msra.mxu0 %v724
      %764 = vmatpush.msra.mxu0 %v723
      %765 = vmatpush.msra.mxu0 %v722
      %766 = vmatpush.msra.mxu0 %v721
      %767 = vmatpush.msra.mxu0 %v720
      %768 = vmatpush.msra.mxu0 %v719
      %769 = vmatpush.msra.mxu0 %v718
      %770 = vmatpush.msra.mxu0 %v717
      %771 = vmatpush.msra.mxu0 %v716
      %772 = vmatpush.msra.mxu0 %v715
      %773 = vmatpush.msra.mxu0 %v714
      %774 = vmatpush.msra.mxu0 %v713
      %775 = vmatpush.msra.mxu0 %v712
      %776 = vmatmul.f32.gmra.mxu0 %v759
      %v777 = vpop.f32.mrf.mxu0
      %v778 = vadd.f32 0.0, %v777
      %779 = vdwg.mxu0
      %v780 = vld [vmem:[%s6] sm:$0xff]
      %v781 = vld [vmem:[%s6 + $0x8] sm:$0xff]
      %v782 = vld [vmem:[%s6 + $0x10] sm:$0xff]
      %v783 = vld [vmem:[%s6 + $0x18] sm:$0xff]
      %v784 = vld [vmem:[%s6 + $0x20] sm:$0xff]
      %v785 = vld [vmem:[%s6 + $0x28] sm:$0xff]
      %v786 = vld [vmem:[%s6 + $0x30] sm:$0xff]
      %v787 = vld [vmem:[%s6 + $0x38] sm:$0xff]
      %v788 = vld [vmem:[%s6 + $0x40] sm:$0xff]
      %v789 = vld [vmem:[%s6 + $0x48] sm:$0xff]
      %v790 = vld [vmem:[%s6 + $0x50] sm:$0xff]
      %v791 = vld [vmem:[%s6 + $0x58] sm:$0xff]
      %v792 = vld [vmem:[%s6 + $0x60] sm:$0xff]
      %v793 = vld [vmem:[%s6 + $0x68] sm:$0xff]
      %v794 = vld [vmem:[%s6 + $0x70] sm:$0xff]
      %v795 = vld [vmem:[%s6 + $0x78] sm:$0xff]
      %796 = vmatpush.msra.mxu0 %v795
      %797 = vmatpush.msra.mxu0 %v794
      %798 = vmatpush.msra.mxu0 %v793
      %799 = vmatpush.msra.mxu0 %v792
      %800 = vmatpush.msra.mxu0 %v791
      %801 = vmatpush.msra.mxu0 %v790
      %802 = vmatpush.msra.mxu0 %v789
      %803 = vmatpush.msra.mxu0 %v788
      %804 = vmatpush.msra.mxu0 %v787
      %805 = vmatpush.msra.mxu0 %v786
      %806 = vmatpush.msra.mxu0 %v785
      %807 = vmatpush.msra.mxu0 %v784
      %808 = vmatpush.msra.mxu0 %v783
      %809 = vmatpush.msra.mxu0 %v782
      %810 = vmatpush.msra.mxu0 %v781
      %811 = vmatpush.msra.mxu0 %v780
      %812 = vmatmul.f32.gmra.mxu0 %v778
      %v813 = vpop.f32.mrf.mxu0
      %v814 = vadd.f32 0.0, %v813
      %815 = vdwg.mxu0
      %v816 = vsub.f32 0.0, %v814
      %v817 = vmul.f32 %v816, 1.442695
      %v818 = vpow.pop %v817
      %v819 = vadd.f32 %v818, 1.0
      %v820 = vrcp.pop %v819
      %v821 = vmul.f32 %v819, %v820
      %v822 = vsub.f32 1.0, %v821
      %v823 = vmul.f32 %v820, %v822
      %v824 = vadd.f32 %v820, %v823
      %vm825 = vweird.f32 %v819
      %vm826 = vweird.f32 %v820
      %vm827 = vmor %vm825, %vm826
      %v828 = vsel %vm827, %v820, %v824
      %v829 = vand.u32 2147483647, %v819
      %vm830 = vcmp.eq.f32.partialorder %v829, 8.507059e+37
      %v831 = vand.u32 %v819, 2147483648
      %v832 = vor.u32 1.1754944e-38, %v831
      %v833 = vsel %vm830, %v832, %v828
      %v834 = vmul.f32 1.0, %v833
      %v835 = vperm.slane %v834, 0
      %v836 = vmul.f32 %v835, %v441
      %v837 = vmul.f32 %v835, %v442
      %v838 = vadd.f32 %v778, 1e-05
      %v839 = vrsqrt.pop %v838
      %v840 = vmul.f32 %v839, %v838
      %v841 = vmul.f32 %v840, %v839
      %v842 = vmul.f32 0.5, %v841
      %v843 = vsub.f32 1.5, %v842
      %v844 = vmul.f32 %v839, %v843
      %vm845 = vweird.f32 %v838
      %vm846 = vweird.f32 %v839
      %vm847 = vmor %vm845, %vm846
      %v848 = vsel %vm847, %v839, %v844
      %v849 = vperm.slane %v848, 0
      %v850 = vmul.f32 %v749, %v849
      %v851 = vmul.f32 %v750, %v849
      %852 = vmatpush.msra.mxu0 0.0
      %853 = vmatpush.msra.mxu0 0.0
      %854 = vmatpush.msra.mxu0 0.0
      %855 = vmatpush.msra.mxu0 0.0
      %856 = vmatpush.msra.mxu0 0.0
      %857 = vmatpush.msra.mxu0 0.0
      %858 = vmatpush.msra.mxu0 0.0
      %859 = vmatpush.msra.mxu0 0.0
      %860 = vmatpush.msra.mxu0 0.0
      %861 = vmatpush.msra.mxu0 0.0
      %862 = vmatpush.msra.mxu0 0.0
      %863 = vmatpush.msra.mxu0 0.0
      %864 = vmatpush.msra.mxu0 0.0
      %865 = vmatpush.msra.mxu0 0.0
      %866 = vmatpush.msra.mxu0 %v704
      %867 = vmatpush.msra.mxu0 %v703
      %868 = vmatmul.f32.gmra.mxu0 %v449
      %v869 = vpop.f32.mrf.mxu0
      %v870 = vadd.f32 0.0, %v869
      %871 = vmatmul.f32.gmra.mxu0 %v452
      %v872 = vpop.f32.mrf.mxu0
      %v873 = vadd.f32 0.0, %v872
      %874 = vdwg.mxu0
      %875 = vmatpush.msra.mxu0 0.0
      %876 = vmatpush.msra.mxu0 0.0
      %877 = vmatpush.msra.mxu0 0.0
      %878 = vmatpush.msra.mxu0 0.0
      %879 = vmatpush.msra.mxu0 0.0
      %880 = vmatpush.msra.mxu0 0.0
      %881 = vmatpush.msra.mxu0 0.0
      %882 = vmatpush.msra.mxu0 0.0
      %883 = vmatpush.msra.mxu0 0.0
      %884 = vmatpush.msra.mxu0 0.0
      %885 = vmatpush.msra.mxu0 0.0
      %886 = vmatpush.msra.mxu0 0.0
      %887 = vmatpush.msra.mxu0 0.0
      %888 = vmatpush.msra.mxu0 0.0
      %889 = vmatpush.msra.mxu0 %v837
      %890 = vmatpush.msra.mxu0 %v836
      %891 = vmatmul.f32.gmra.mxu0 %v449
      %v892 = vpop.f32.mrf.mxu0
      %v893 = vadd.f32 0.0, %v892
      %894 = vmatmul.f32.gmra.mxu0 %v452
      %v895 = vpop.f32.mrf.mxu0
      %v896 = vadd.f32 0.0, %v895
      %897 = vdwg.mxu0
      %898 = vmatpush.msra.mxu0 0.0
      %899 = vmatpush.msra.mxu0 0.0
      %900 = vmatpush.msra.mxu0 0.0
      %901 = vmatpush.msra.mxu0 0.0
      %902 = vmatpush.msra.mxu0 0.0
      %903 = vmatpush.msra.mxu0 0.0
      %904 = vmatpush.msra.mxu0 0.0
      %905 = vmatpush.msra.mxu0 0.0
      %906 = vmatpush.msra.mxu0 0.0
      %907 = vmatpush.msra.mxu0 0.0
      %908 = vmatpush.msra.mxu0 0.0
      %909 = vmatpush.msra.mxu0 0.0
      %910 = vmatpush.msra.mxu0 0.0
      %911 = vmatpush.msra.mxu0 0.0
      %912 = vmatpush.msra.mxu0 %v704
      %913 = vmatpush.msra.mxu0 %v703
      %914 = vmatmul.f32.gmra.mxu0 %v478
      %v915 = vpop.f32.mrf.mxu0
      %v916 = vadd.f32 0.0, %v915
      %917 = vmatmul.f32.gmra.mxu0 %v481
      %v918 = vpop.f32.mrf.mxu0
      %v919 = vadd.f32 0.0, %v918
      %920 = vdwg.mxu0
      %921 = vmatpush.msra.mxu0 0.0
      %922 = vmatpush.msra.mxu0 0.0
      %923 = vmatpush.msra.mxu0 0.0
      %924 = vmatpush.msra.mxu0 0.0
      %925 = vmatpush.msra.mxu0 0.0
      %926 = vmatpush.msra.mxu0 0.0
      %927 = vmatpush.msra.mxu0 0.0
      %928 = vmatpush.msra.mxu0 0.0
      %929 = vmatpush.msra.mxu0 0.0
      %930 = vmatpush.msra.mxu0 0.0
      %931 = vmatpush.msra.mxu0 0.0
      %932 = vmatpush.msra.mxu0 0.0
      %933 = vmatpush.msra.mxu0 0.0
      %934 = vmatpush.msra.mxu0 0.0
      %935 = vmatpush.msra.mxu0 %v837
      %936 = vmatpush.msra.mxu0 %v836
      %937 = vmatmul.f32.gmra.mxu0 %v478
      %v938 = vpop.f32.mrf.mxu0
      %v939 = vadd.f32 0.0, %v938
      %940 = vmatmul.f32.gmra.mxu0 %v481
      %v941 = vpop.f32.mrf.mxu0
      %v942 = vadd.f32 0.0, %v941
      %943 = vdwg.mxu0
      %v944 = vld [vmem:[%s7] sm:$0xff]
      %v945 = vld [vmem:[%s7 + $0x8] sm:$0xff]
      %v946 = vld [vmem:[%s7 + $0x10] sm:$0xff]
      %v947 = vld [vmem:[%s7 + $0x18] sm:$0xff]
      %v948 = vld [vmem:[%s7 + $0x20] sm:$0xff]
      %v949 = vld [vmem:[%s7 + $0x28] sm:$0xff]
      %v950 = vld [vmem:[%s7 + $0x30] sm:$0xff]
      %v951 = vld [vmem:[%s7 + $0x38] sm:$0xff]
      %v952 = vld [vmem:[%s7 + $0x40] sm:$0xff]
      %v953 = vld [vmem:[%s7 + $0x48] sm:$0xff]
      %v954 = vld [vmem:[%s7 + $0x50] sm:$0xff]
      %v955 = vld [vmem:[%s7 + $0x58] sm:$0xff]
      %v956 = vld [vmem:[%s7 + $0x60] sm:$0xff]
      %v957 = vld [vmem:[%s7 + $0x68] sm:$0xff]
      %v958 = vld [vmem:[%s7 + $0x70] sm:$0xff]
      %v959 = vld [vmem:[%s7 + $0x78] sm:$0xff]
      %v960 = vld [vmem:[%s7 + $0x80] sm:$0xff]
      %v961 = vld [vmem:[%s7 + $0x88] sm:$0xff]
      %v962 = vld [vmem:[%s7 + $0x90] sm:$0xff]
      %v963 = vld [vmem:[%s7 + $0x98] sm:$0xff]
      %v964 = vld [vmem:[%s7 + $0xa0] sm:$0xff]
      %v965 = vld [vmem:[%s7 + $0xa8] sm:$0xff]
      %v966 = vld [vmem:[%s7 + $0xb0] sm:$0xff]
      %v967 = vld [vmem:[%s7 + $0xb8] sm:$0xff]
      %v968 = vld [vmem:[%s7 + $0xc0] sm:$0xff]
      %v969 = vld [vmem:[%s7 + $0xc8] sm:$0xff]
      %v970 = vld [vmem:[%s7 + $0xd0] sm:$0xff]
      %v971 = vld [vmem:[%s7 + $0xd8] sm:$0xff]
      %v972 = vld [vmem:[%s7 + $0xe0] sm:$0xff]
      %v973 = vld [vmem:[%s7 + $0xe8] sm:$0xff]
      %v974 = vld [vmem:[%s7 + $0xf0] sm:$0xff]
      %v975 = vld [vmem:[%s7 + $0xf8] sm:$0xff]
      %v976 = vld [vmem:[%s7 + $0x100] sm:$0xff]
      %v977 = vld [vmem:[%s7 + $0x108] sm:$0xff]
      %v978 = vld [vmem:[%s7 + $0x110] sm:$0xff]
      %v979 = vld [vmem:[%s7 + $0x118] sm:$0xff]
      %v980 = vld [vmem:[%s7 + $0x120] sm:$0xff]
      %v981 = vld [vmem:[%s7 + $0x128] sm:$0xff]
      %v982 = vld [vmem:[%s7 + $0x130] sm:$0xff]
      %v983 = vld [vmem:[%s7 + $0x138] sm:$0xff]
      %v984 = vld [vmem:[%s7 + $0x140] sm:$0xff]
      %v985 = vld [vmem:[%s7 + $0x148] sm:$0xff]
      %v986 = vld [vmem:[%s7 + $0x150] sm:$0xff]
      %v987 = vld [vmem:[%s7 + $0x158] sm:$0xff]
      %v988 = vld [vmem:[%s7 + $0x160] sm:$0xff]
      %v989 = vld [vmem:[%s7 + $0x168] sm:$0xff]
      %v990 = vld [vmem:[%s7 + $0x170] sm:$0xff]
      %v991 = vld [vmem:[%s7 + $0x178] sm:$0xff]
      %v992 = vld [vmem:[%s7 + $0x180] sm:$0xff]
      %v993 = vld [vmem:[%s7 + $0x188] sm:$0xff]
      %v994 = vld [vmem:[%s7 + $0x190] sm:$0xff]
      %v995 = vld [vmem:[%s7 + $0x198] sm:$0xff]
      %v996 = vld [vmem:[%s7 + $0x1a0] sm:$0xff]
      %v997 = vld [vmem:[%s7 + $0x1a8] sm:$0xff]
      %v998 = vld [vmem:[%s7 + $0x1b0] sm:$0xff]
      %v999 = vld [vmem:[%s7 + $0x1b8] sm:$0xff]
      %v1000 = vld [vmem:[%s7 + $0x1c0] sm:$0xff]
      %v1001 = vld [vmem:[%s7 + $0x1c8] sm:$0xff]
      %v1002 = vld [vmem:[%s7 + $0x1d0] sm:$0xff]
      %v1003 = vld [vmem:[%s7 + $0x1d8] sm:$0xff]
      %v1004 = vld [vmem:[%s7 + $0x1e0] sm:$0xff]
      %v1005 = vld [vmem:[%s7 + $0x1e8] sm:$0xff]
      %v1006 = vld [vmem:[%s7 + $0x1f0] sm:$0xff]
      %v1007 = vld [vmem:[%s7 + $0x1f8] sm:$0xff]
      %s1008 = scalar_lea.vmem %s7, 512
      %v1009 = vld [vmem:[%s1008] sm:$0xff]
      %v1010 = vld [vmem:[%s1008 + $0x8] sm:$0xff]
      %v1011 = vld [vmem:[%s1008 + $0x10] sm:$0xff]
      %v1012 = vld [vmem:[%s1008 + $0x18] sm:$0xff]
      %v1013 = vld [vmem:[%s1008 + $0x20] sm:$0xff]
      %v1014 = vld [vmem:[%s1008 + $0x28] sm:$0xff]
      %v1015 = vld [vmem:[%s1008 + $0x30] sm:$0xff]
      %v1016 = vld [vmem:[%s1008 + $0x38] sm:$0xff]
      %v1017 = vld [vmem:[%s1008 + $0x40] sm:$0xff]
      %v1018 = vld [vmem:[%s1008 + $0x48] sm:$0xff]
      %v1019 = vld [vmem:[%s1008 + $0x50] sm:$0xff]
      %v1020 = vld [vmem:[%s1008 + $0x58] sm:$0xff]
      %v1021 = vld [vmem:[%s1008 + $0x60] sm:$0xff]
      %v1022 = vld [vmem:[%s1008 + $0x68] sm:$0xff]
      %v1023 = vld [vmem:[%s1008 + $0x70] sm:$0xff]
      %v1024 = vld [vmem:[%s1008 + $0x78] sm:$0xff]
      %v1025 = vld [vmem:[%s1008 + $0x80] sm:$0xff]
      %v1026 = vld [vmem:[%s1008 + $0x88] sm:$0xff]
      %v1027 = vld [vmem:[%s1008 + $0x90] sm:$0xff]
      %v1028 = vld [vmem:[%s1008 + $0x98] sm:$0xff]
      %v1029 = vld [vmem:[%s1008 + $0xa0] sm:$0xff]
      %v1030 = vld [vmem:[%s1008 + $0xa8] sm:$0xff]
      %v1031 = vld [vmem:[%s1008 + $0xb0] sm:$0xff]
      %v1032 = vld [vmem:[%s1008 + $0xb8] sm:$0xff]
      %v1033 = vld [vmem:[%s1008 + $0xc0] sm:$0xff]
      %v1034 = vld [vmem:[%s1008 + $0xc8] sm:$0xff]
      %v1035 = vld [vmem:[%s1008 + $0xd0] sm:$0xff]
      %v1036 = vld [vmem:[%s1008 + $0xd8] sm:$0xff]
      %v1037 = vld [vmem:[%s1008 + $0xe0] sm:$0xff]
      %v1038 = vld [vmem:[%s1008 + $0xe8] sm:$0xff]
      %v1039 = vld [vmem:[%s1008 + $0xf0] sm:$0xff]
      %v1040 = vld [vmem:[%s1008 + $0xf8] sm:$0xff]
      %v1041 = vld [vmem:[%s1008 + $0x100] sm:$0xff]
      %v1042 = vld [vmem:[%s1008 + $0x108] sm:$0xff]
      %v1043 = vld [vmem:[%s1008 + $0x110] sm:$0xff]
      %v1044 = vld [vmem:[%s1008 + $0x118] sm:$0xff]
      %v1045 = vld [vmem:[%s1008 + $0x120] sm:$0xff]
      %v1046 = vld [vmem:[%s1008 + $0x128] sm:$0xff]
      %v1047 = vld [vmem:[%s1008 + $0x130] sm:$0xff]
      %v1048 = vld [vmem:[%s1008 + $0x138] sm:$0xff]
      %v1049 = vld [vmem:[%s1008 + $0x140] sm:$0xff]
      %v1050 = vld [vmem:[%s1008 + $0x148] sm:$0xff]
      %v1051 = vld [vmem:[%s1008 + $0x150] sm:$0xff]
      %v1052 = vld [vmem:[%s1008 + $0x158] sm:$0xff]
      %v1053 = vld [vmem:[%s1008 + $0x160] sm:$0xff]
      %v1054 = vld [vmem:[%s1008 + $0x168] sm:$0xff]
      %v1055 = vld [vmem:[%s1008 + $0x170] sm:$0xff]
      %v1056 = vld [vmem:[%s1008 + $0x178] sm:$0xff]
      %v1057 = vld [vmem:[%s1008 + $0x180] sm:$0xff]
      %v1058 = vld [vmem:[%s1008 + $0x188] sm:$0xff]
      %v1059 = vld [vmem:[%s1008 + $0x190] sm:$0xff]
      %v1060 = vld [vmem:[%s1008 + $0x198] sm:$0xff]
      %v1061 = vld [vmem:[%s1008 + $0x1a0] sm:$0xff]
      %v1062 = vld [vmem:[%s1008 + $0x1a8] sm:$0xff]
      %v1063 = vld [vmem:[%s1008 + $0x1b0] sm:$0xff]
      %v1064 = vld [vmem:[%s1008 + $0x1b8] sm:$0xff]
      %v1065 = vld [vmem:[%s1008 + $0x1c0] sm:$0xff]
      %v1066 = vld [vmem:[%s1008 + $0x1c8] sm:$0xff]
      %v1067 = vld [vmem:[%s1008 + $0x1d0] sm:$0xff]
      %v1068 = vld [vmem:[%s1008 + $0x1d8] sm:$0xff]
      %v1069 = vld [vmem:[%s1008 + $0x1e0] sm:$0xff]
      %v1070 = vld [vmem:[%s1008 + $0x1e8] sm:$0xff]
      %v1071 = vld [vmem:[%s1008 + $0x1f0] sm:$0xff]
      %v1072 = vld [vmem:[%s1008 + $0x1f8] sm:$0xff]
      %1073 = vmatpush.msra.mxu0 %v1039
      %1074 = vmatpush.msra.mxu0 %v1037
      %1075 = vmatpush.msra.mxu0 %v1035
      %1076 = vmatpush.msra.mxu0 %v1033
      %1077 = vmatpush.msra.mxu0 %v1031
      %1078 = vmatpush.msra.mxu0 %v1029
      %1079 = vmatpush.msra.mxu0 %v1027
      %1080 = vmatpush.msra.mxu0 %v1025
      %1081 = vmatpush.msra.mxu0 %v1023
      %1082 = vmatpush.msra.mxu0 %v1021
      %1083 = vmatpush.msra.mxu0 %v1019
      %1084 = vmatpush.msra.mxu0 %v1017
      %1085 = vmatpush.msra.mxu0 %v1015
      %1086 = vmatpush.msra.mxu0 %v1013
      %1087 = vmatpush.msra.mxu0 %v1011
      %1088 = vmatpush.msra.mxu0 %v1009
      %1089 = vmatmul.f32.gmra.mxu0 %v703
      %v1090 = vpop.f32.mrf.mxu0
      %v1091 = vadd.f32 0.0, %v1090
      %1092 = vmatmul.f32.gmra.mxu0 %v704
      %v1093 = vpop.f32.mrf.mxu0
      %v1094 = vadd.f32 0.0, %v1093
      %1095 = vdwg.mxu0
      %1096 = vmatpush.msra.mxu0 %v1071
      %1097 = vmatpush.msra.mxu0 %v1069
      %1098 = vmatpush.msra.mxu0 %v1067
      %1099 = vmatpush.msra.mxu0 %v1065
      %1100 = vmatpush.msra.mxu0 %v1063
      %1101 = vmatpush.msra.mxu0 %v1061
      %1102 = vmatpush.msra.mxu0 %v1059
      %1103 = vmatpush.msra.mxu0 %v1057
      %1104 = vmatpush.msra.mxu0 %v1055
      %1105 = vmatpush.msra.mxu0 %v1053
      %1106 = vmatpush.msra.mxu0 %v1051
      %1107 = vmatpush.msra.mxu0 %v1049
      %1108 = vmatpush.msra.mxu0 %v1047
      %1109 = vmatpush.msra.mxu0 %v1045
      %1110 = vmatpush.msra.mxu0 %v1043
      %1111 = vmatpush.msra.mxu0 %v1041
      %1112 = vmatmul.f32.gmra.mxu0 %v836
      %v1113 = vpop.f32.mrf.mxu0
      %v1114 = vadd.f32 %v1091, %v1113
      %1115 = vmatmul.f32.gmra.mxu0 %v837
      %v1116 = vpop.f32.mrf.mxu0
      %v1117 = vadd.f32 %v1094, %v1116
      %1118 = vdwg.mxu0
      %1119 = vmatpush.msra.mxu0 %v1040
      %1120 = vmatpush.msra.mxu0 %v1038
      %1121 = vmatpush.msra.mxu0 %v1036
      %1122 = vmatpush.msra.mxu0 %v1034
      %1123 = vmatpush.msra.mxu0 %v1032
      %1124 = vmatpush.msra.mxu0 %v1030
      %1125 = vmatpush.msra.mxu0 %v1028
      %1126 = vmatpush.msra.mxu0 %v1026
      %1127 = vmatpush.msra.mxu0 %v1024
      %1128 = vmatpush.msra.mxu0 %v1022
      %1129 = vmatpush.msra.mxu0 %v1020
      %1130 = vmatpush.msra.mxu0 %v1018
      %1131 = vmatpush.msra.mxu0 %v1016
      %1132 = vmatpush.msra.mxu0 %v1014
      %1133 = vmatpush.msra.mxu0 %v1012
      %1134 = vmatpush.msra.mxu0 %v1010
      %1135 = vmatmul.f32.gmra.mxu0 %v703
      %v1136 = vpop.f32.mrf.mxu0
      %v1137 = vadd.f32 0.0, %v1136
      %1138 = vmatmul.f32.gmra.mxu0 %v704
      %v1139 = vpop.f32.mrf.mxu0
      %v1140 = vadd.f32 0.0, %v1139
      %1141 = vdwg.mxu0
      %1142 = vmatpush.msra.mxu0 %v1072
      %1143 = vmatpush.msra.mxu0 %v1070
      %1144 = vmatpush.msra.mxu0 %v1068
      %1145 = vmatpush.msra.mxu0 %v1066
      %1146 = vmatpush.msra.mxu0 %v1064
      %1147 = vmatpush.msra.mxu0 %v1062
      %1148 = vmatpush.msra.mxu0 %v1060
      %1149 = vmatpush.msra.mxu0 %v1058
      %1150 = vmatpush.msra.mxu0 %v1056
      %1151 = vmatpush.msra.mxu0 %v1054
      %1152 = vmatpush.msra.mxu0 %v1052
      %1153 = vmatpush.msra.mxu0 %v1050
      %1154 = vmatpush.msra.mxu0 %v1048
      %1155 = vmatpush.msra.mxu0 %v1046
      %1156 = vmatpush.msra.mxu0 %v1044
      %1157 = vmatpush.msra.mxu0 %v1042
      %1158 = vmatmul.f32.gmra.mxu0 %v836
      %v1159 = vpop.f32.mrf.mxu0
      %v1160 = vadd.f32 %v1137, %v1159
      %1161 = vmatmul.f32.gmra.mxu0 %v837
      %v1162 = vpop.f32.mrf.mxu0
      %v1163 = vadd.f32 %v1140, %v1162
      %1164 = vdwg.mxu0
      %1165 = vmatpush.msra.mxu0 %v974
      %1166 = vmatpush.msra.mxu0 %v972
      %1167 = vmatpush.msra.mxu0 %v970
      %1168 = vmatpush.msra.mxu0 %v968
      %1169 = vmatpush.msra.mxu0 %v966
      %1170 = vmatpush.msra.mxu0 %v964
      %1171 = vmatpush.msra.mxu0 %v962
      %1172 = vmatpush.msra.mxu0 %v960
      %1173 = vmatpush.msra.mxu0 %v958
      %1174 = vmatpush.msra.mxu0 %v956
      %1175 = vmatpush.msra.mxu0 %v954
      %1176 = vmatpush.msra.mxu0 %v952
      %1177 = vmatpush.msra.mxu0 %v950
      %1178 = vmatpush.msra.mxu0 %v948
      %1179 = vmatpush.msra.mxu0 %v946
      %1180 = vmatpush.msra.mxu0 %v944
      %1181 = vmatmul.f32.gmra.mxu0 %v870
      %v1182 = vpop.f32.mrf.mxu0
      %v1183 = vadd.f32 %v1114, %v1182
      %1184 = vmatmul.f32.gmra.mxu0 %v873
      %v1185 = vpop.f32.mrf.mxu0
      %v1186 = vadd.f32 %v1117, %v1185
      %1187 = vdwg.mxu0
      %1188 = vmatpush.msra.mxu0 %v1006
      %1189 = vmatpush.msra.mxu0 %v1004
      %1190 = vmatpush.msra.mxu0 %v1002
      %1191 = vmatpush.msra.mxu0 %v1000
      %1192 = vmatpush.msra.mxu0 %v998
      %1193 = vmatpush.msra.mxu0 %v996
      %1194 = vmatpush.msra.mxu0 %v994
      %1195 = vmatpush.msra.mxu0 %v992
      %1196 = vmatpush.msra.mxu0 %v990
      %1197 = vmatpush.msra.mxu0 %v988
      %1198 = vmatpush.msra.mxu0 %v986
      %1199 = vmatpush.msra.mxu0 %v984
      %1200 = vmatpush.msra.mxu0 %v982
      %1201 = vmatpush.msra.mxu0 %v980
      %1202 = vmatpush.msra.mxu0 %v978
      %1203 = vmatpush.msra.mxu0 %v976
      %1204 = vmatmul.f32.gmra.mxu0 %v893
      %v1205 = vpop.f32.mrf.mxu0
      %v1206 = vadd.f32 %v1183, %v1205
      %1207 = vmatmul.f32.gmra.mxu0 %v896
      %v1208 = vpop.f32.mrf.mxu0
      %v1209 = vadd.f32 %v1186, %v1208
      %1210 = vdwg.mxu0
      %1211 = vmatpush.msra.mxu0 %v975
      %1212 = vmatpush.msra.mxu0 %v973
      %1213 = vmatpush.msra.mxu0 %v971
      %1214 = vmatpush.msra.mxu0 %v969
      %1215 = vmatpush.msra.mxu0 %v967
      %1216 = vmatpush.msra.mxu0 %v965
      %1217 = vmatpush.msra.mxu0 %v963
      %1218 = vmatpush.msra.mxu0 %v961
      %1219 = vmatpush.msra.mxu0 %v959
      %1220 = vmatpush.msra.mxu0 %v957
      %1221 = vmatpush.msra.mxu0 %v955
      %1222 = vmatpush.msra.mxu0 %v953
      %1223 = vmatpush.msra.mxu0 %v951
      %1224 = vmatpush.msra.mxu0 %v949
      %1225 = vmatpush.msra.mxu0 %v947
      %1226 = vmatpush.msra.mxu0 %v945
      %1227 = vmatmul.f32.gmra.mxu0 %v870
      %v1228 = vpop.f32.mrf.mxu0
      %v1229 = vadd.f32 %v1160, %v1228
      %1230 = vmatmul.f32.gmra.mxu0 %v873
      %v1231 = vpop.f32.mrf.mxu0
      %v1232 = vadd.f32 %v1163, %v1231
      %1233 = vdwg.mxu0
      %1234 = vmatpush.msra.mxu0 %v1007
      %1235 = vmatpush.msra.mxu0 %v1005
      %1236 = vmatpush.msra.mxu0 %v1003
      %1237 = vmatpush.msra.mxu0 %v1001
      %1238 = vmatpush.msra.mxu0 %v999
      %1239 = vmatpush.msra.mxu0 %v997
      %1240 = vmatpush.msra.mxu0 %v995
      %1241 = vmatpush.msra.mxu0 %v993
      %1242 = vmatpush.msra.mxu0 %v991
      %1243 = vmatpush.msra.mxu0 %v989
      %1244 = vmatpush.msra.mxu0 %v987
      %1245 = vmatpush.msra.mxu0 %v985
      %1246 = vmatpush.msra.mxu0 %v983
      %1247 = vmatpush.msra.mxu0 %v981
      %1248 = vmatpush.msra.mxu0 %v979
      %1249 = vmatpush.msra.mxu0 %v977
      %1250 = vmatmul.f32.gmra.mxu0 %v893
      %v1251 = vpop.f32.mrf.mxu0
      %v1252 = vadd.f32 %v1229, %v1251
      %1253 = vmatmul.f32.gmra.mxu0 %v896
      %v1254 = vpop.f32.mrf.mxu0
      %v1255 = vadd.f32 %v1232, %v1254
      %1256 = vdwg.mxu0
      %s1257 = scalar_lea.vmem %s7, 1024
      %v1258 = vld [vmem:[%s1257] sm:$0xff]
      %v1259 = vld [vmem:[%s1257 + $0x8] sm:$0xff]
      %v1260 = vld [vmem:[%s1257 + $0x10] sm:$0xff]
      %v1261 = vld [vmem:[%s1257 + $0x18] sm:$0xff]
      %v1262 = vld [vmem:[%s1257 + $0x20] sm:$0xff]
      %v1263 = vld [vmem:[%s1257 + $0x28] sm:$0xff]
      %v1264 = vld [vmem:[%s1257 + $0x30] sm:$0xff]
      %v1265 = vld [vmem:[%s1257 + $0x38] sm:$0xff]
      %v1266 = vld [vmem:[%s1257 + $0x40] sm:$0xff]
      %v1267 = vld [vmem:[%s1257 + $0x48] sm:$0xff]
      %v1268 = vld [vmem:[%s1257 + $0x50] sm:$0xff]
      %v1269 = vld [vmem:[%s1257 + $0x58] sm:$0xff]
      %v1270 = vld [vmem:[%s1257 + $0x60] sm:$0xff]
      %v1271 = vld [vmem:[%s1257 + $0x68] sm:$0xff]
      %v1272 = vld [vmem:[%s1257 + $0x70] sm:$0xff]
      %v1273 = vld [vmem:[%s1257 + $0x78] sm:$0xff]
      %v1274 = vld [vmem:[%s1257 + $0x80] sm:$0xff]
      %v1275 = vld [vmem:[%s1257 + $0x88] sm:$0xff]
      %v1276 = vld [vmem:[%s1257 + $0x90] sm:$0xff]
      %v1277 = vld [vmem:[%s1257 + $0x98] sm:$0xff]
      %v1278 = vld [vmem:[%s1257 + $0xa0] sm:$0xff]
      %v1279 = vld [vmem:[%s1257 + $0xa8] sm:$0xff]
      %v1280 = vld [vmem:[%s1257 + $0xb0] sm:$0xff]
      %v1281 = vld [vmem:[%s1257 + $0xb8] sm:$0xff]
      %v1282 = vld [vmem:[%s1257 + $0xc0] sm:$0xff]
      %v1283 = vld [vmem:[%s1257 + $0xc8] sm:$0xff]
      %v1284 = vld [vmem:[%s1257 + $0xd0] sm:$0xff]
      %v1285 = vld [vmem:[%s1257 + $0xd8] sm:$0xff]
      %v1286 = vld [vmem:[%s1257 + $0xe0] sm:$0xff]
      %v1287 = vld [vmem:[%s1257 + $0xe8] sm:$0xff]
      %v1288 = vld [vmem:[%s1257 + $0xf0] sm:$0xff]
      %v1289 = vld [vmem:[%s1257 + $0xf8] sm:$0xff]
      %v1290 = vld [vmem:[%s1257 + $0x100] sm:$0xff]
      %v1291 = vld [vmem:[%s1257 + $0x108] sm:$0xff]
      %v1292 = vld [vmem:[%s1257 + $0x110] sm:$0xff]
      %v1293 = vld [vmem:[%s1257 + $0x118] sm:$0xff]
      %v1294 = vld [vmem:[%s1257 + $0x120] sm:$0xff]
      %v1295 = vld [vmem:[%s1257 + $0x128] sm:$0xff]
      %v1296 = vld [vmem:[%s1257 + $0x130] sm:$0xff]
      %v1297 = vld [vmem:[%s1257 + $0x138] sm:$0xff]
      %v1298 = vld [vmem:[%s1257 + $0x140] sm:$0xff]
      %v1299 = vld [vmem:[%s1257 + $0x148] sm:$0xff]
      %v1300 = vld [vmem:[%s1257 + $0x150] sm:$0xff]
      %v1301 = vld [vmem:[%s1257 + $0x158] sm:$0xff]
      %v1302 = vld [vmem:[%s1257 + $0x160] sm:$0xff]
      %v1303 = vld [vmem:[%s1257 + $0x168] sm:$0xff]
      %v1304 = vld [vmem:[%s1257 + $0x170] sm:$0xff]
      %v1305 = vld [vmem:[%s1257 + $0x178] sm:$0xff]
      %v1306 = vld [vmem:[%s1257 + $0x180] sm:$0xff]
      %v1307 = vld [vmem:[%s1257 + $0x188] sm:$0xff]
      %v1308 = vld [vmem:[%s1257 + $0x190] sm:$0xff]
      %v1309 = vld [vmem:[%s1257 + $0x198] sm:$0xff]
      %v1310 = vld [vmem:[%s1257 + $0x1a0] sm:$0xff]
      %v1311 = vld [vmem:[%s1257 + $0x1a8] sm:$0xff]
      %v1312 = vld [vmem:[%s1257 + $0x1b0] sm:$0xff]
      %v1313 = vld [vmem:[%s1257 + $0x1b8] sm:$0xff]
      %v1314 = vld [vmem:[%s1257 + $0x1c0] sm:$0xff]
      %v1315 = vld [vmem:[%s1257 + $0x1c8] sm:$0xff]
      %v1316 = vld [vmem:[%s1257 + $0x1d0] sm:$0xff]
      %v1317 = vld [vmem:[%s1257 + $0x1d8] sm:$0xff]
      %v1318 = vld [vmem:[%s1257 + $0x1e0] sm:$0xff]
      %v1319 = vld [vmem:[%s1257 + $0x1e8] sm:$0xff]
      %v1320 = vld [vmem:[%s1257 + $0x1f0] sm:$0xff]
      %v1321 = vld [vmem:[%s1257 + $0x1f8] sm:$0xff]
      %1322 = vmatpush.msra.mxu0 %v1288
      %1323 = vmatpush.msra.mxu0 %v1286
      %1324 = vmatpush.msra.mxu0 %v1284
      %1325 = vmatpush.msra.mxu0 %v1282
      %1326 = vmatpush.msra.mxu0 %v1280
      %1327 = vmatpush.msra.mxu0 %v1278
      %1328 = vmatpush.msra.mxu0 %v1276
      %1329 = vmatpush.msra.mxu0 %v1274
      %1330 = vmatpush.msra.mxu0 %v1272
      %1331 = vmatpush.msra.mxu0 %v1270
      %1332 = vmatpush.msra.mxu0 %v1268
      %1333 = vmatpush.msra.mxu0 %v1266
      %1334 = vmatpush.msra.mxu0 %v1264
      %1335 = vmatpush.msra.mxu0 %v1262
      %1336 = vmatpush.msra.mxu0 %v1260
      %1337 = vmatpush.msra.mxu0 %v1258
      %1338 = vmatmul.f32.gmra.mxu0 %v916
      %v1339 = vpop.f32.mrf.mxu0
      %v1340 = vadd.f32 0.0, %v1339
      %1341 = vmatmul.f32.gmra.mxu0 %v919
      %v1342 = vpop.f32.mrf.mxu0
      %v1343 = vadd.f32 0.0, %v1342
      %1344 = vdwg.mxu0
      %1345 = vmatpush.msra.mxu0 %v1320
      %1346 = vmatpush.msra.mxu0 %v1318
      %1347 = vmatpush.msra.mxu0 %v1316
      %1348 = vmatpush.msra.mxu0 %v1314
      %1349 = vmatpush.msra.mxu0 %v1312
      %1350 = vmatpush.msra.mxu0 %v1310
      %1351 = vmatpush.msra.mxu0 %v1308
      %1352 = vmatpush.msra.mxu0 %v1306
      %1353 = vmatpush.msra.mxu0 %v1304
      %1354 = vmatpush.msra.mxu0 %v1302
      %1355 = vmatpush.msra.mxu0 %v1300
      %1356 = vmatpush.msra.mxu0 %v1298
      %1357 = vmatpush.msra.mxu0 %v1296
      %1358 = vmatpush.msra.mxu0 %v1294
      %1359 = vmatpush.msra.mxu0 %v1292
      %1360 = vmatpush.msra.mxu0 %v1290
      %1361 = vmatmul.f32.gmra.mxu0 %v939
      %v1362 = vpop.f32.mrf.mxu0
      %v1363 = vadd.f32 %v1340, %v1362
      %1364 = vmatmul.f32.gmra.mxu0 %v942
      %v1365 = vpop.f32.mrf.mxu0
      %v1366 = vadd.f32 %v1343, %v1365
      %1367 = vdwg.mxu0
      %1368 = vmatpush.msra.mxu0 %v1289
      %1369 = vmatpush.msra.mxu0 %v1287
      %1370 = vmatpush.msra.mxu0 %v1285
      %1371 = vmatpush.msra.mxu0 %v1283
      %1372 = vmatpush.msra.mxu0 %v1281
      %1373 = vmatpush.msra.mxu0 %v1279
      %1374 = vmatpush.msra.mxu0 %v1277
      %1375 = vmatpush.msra.mxu0 %v1275
      %1376 = vmatpush.msra.mxu0 %v1273
      %1377 = vmatpush.msra.mxu0 %v1271
      %1378 = vmatpush.msra.mxu0 %v1269
      %1379 = vmatpush.msra.mxu0 %v1267
      %1380 = vmatpush.msra.mxu0 %v1265
      %1381 = vmatpush.msra.mxu0 %v1263
      %1382 = vmatpush.msra.mxu0 %v1261
      %1383 = vmatpush.msra.mxu0 %v1259
      %1384 = vmatmul.f32.gmra.mxu0 %v916
      %v1385 = vpop.f32.mrf.mxu0
      %v1386 = vadd.f32 0.0, %v1385
      %1387 = vmatmul.f32.gmra.mxu0 %v919
      %v1388 = vpop.f32.mrf.mxu0
      %v1389 = vadd.f32 0.0, %v1388
      %1390 = vdwg.mxu0
      %1391 = vmatpush.msra.mxu0 %v1321
      %1392 = vmatpush.msra.mxu0 %v1319
      %1393 = vmatpush.msra.mxu0 %v1317
      %1394 = vmatpush.msra.mxu0 %v1315
      %1395 = vmatpush.msra.mxu0 %v1313
      %1396 = vmatpush.msra.mxu0 %v1311
      %1397 = vmatpush.msra.mxu0 %v1309
      %1398 = vmatpush.msra.mxu0 %v1307
      %1399 = vmatpush.msra.mxu0 %v1305
      %1400 = vmatpush.msra.mxu0 %v1303
      %1401 = vmatpush.msra.mxu0 %v1301
      %1402 = vmatpush.msra.mxu0 %v1299
      %1403 = vmatpush.msra.mxu0 %v1297
      %1404 = vmatpush.msra.mxu0 %v1295
      %1405 = vmatpush.msra.mxu0 %v1293
      %1406 = vmatpush.msra.mxu0 %v1291
      %1407 = vmatmul.f32.gmra.mxu0 %v939
      %v1408 = vpop.f32.mrf.mxu0
      %v1409 = vadd.f32 %v1386, %v1408
      %1410 = vmatmul.f32.gmra.mxu0 %v942
      %v1411 = vpop.f32.mrf.mxu0
      %v1412 = vadd.f32 %v1389, %v1411
      %1413 = vdwg.mxu0
      %v1414 = vadd.f32 %v1206, %v1363
      %v1415 = vadd.f32 %v1252, %v1409
      %v1416 = vadd.f32 %v1209, %v1366
      %v1417 = vadd.f32 %v1255, %v1412
      %v1418 = vld [vmem:[%s8] sm:$0x3]
      %v1420 = vperm.slane %v1418, 0
      %v1421 = vperm.slane %v1418, 1
      %v1424 = vadd.f32 %v1414, %v1420
      %v1425 = vadd.f32 %v1415, %v1421
      %v1426 = vadd.f32 %v1416, %v1420
      %v1427 = vadd.f32 %v1417, %v1421
      %v1428 = vmax.f32 %v1424, 0.0
      %v1429 = vmax.f32 %v1425, 0.0
      %v1430 = vmax.f32 %v1426, 0.0
      %v1431 = vmax.f32 %v1427, 0.0
      %1432 = vmatpush.msra.mxu0 0.0
      %1433 = vmatpush.msra.mxu0 0.0
      %1434 = vmatpush.msra.mxu0 0.0
      %1435 = vmatpush.msra.mxu0 0.0
      %1436 = vmatpush.msra.mxu0 0.0
      %1437 = vmatpush.msra.mxu0 0.0
      %1438 = vmatpush.msra.mxu0 0.0
      %1439 = vmatpush.msra.mxu0 0.0
      %1440 = vmatpush.msra.mxu0 0.0
      %1441 = vmatpush.msra.mxu0 0.0
      %1442 = vmatpush.msra.mxu0 0.0
      %1443 = vmatpush.msra.mxu0 0.0
      %1444 = vmatpush.msra.mxu0 0.0
      %1445 = vmatpush.msra.mxu0 0.0
      %1446 = vmatpush.msra.mxu0 %v1430
      %1447 = vmatpush.msra.mxu0 %v1428
      %1448 = vmatmul.f32.gmra.mxu0 %v449
      %v1449 = vpop.f32.mrf.mxu0
      %v1450 = vadd.f32 0.0, %v1449
      %1451 = vmatmul.f32.gmra.mxu0 %v452
      %v1452 = vpop.f32.mrf.mxu0
      %v1453 = vadd.f32 0.0, %v1452
      %1454 = vdwg.mxu0
      %1455 = vmatpush.msra.mxu0 0.0
      %1456 = vmatpush.msra.mxu0 0.0
      %1457 = vmatpush.msra.mxu0 0.0
      %1458 = vmatpush.msra.mxu0 0.0
      %1459 = vmatpush.msra.mxu0 0.0
      %1460 = vmatpush.msra.mxu0 0.0
      %1461 = vmatpush.msra.mxu0 0.0
      %1462 = vmatpush.msra.mxu0 0.0
      %1463 = vmatpush.msra.mxu0 0.0
      %1464 = vmatpush.msra.mxu0 0.0
      %1465 = vmatpush.msra.mxu0 0.0
      %1466 = vmatpush.msra.mxu0 0.0
      %1467 = vmatpush.msra.mxu0 0.0
      %1468 = vmatpush.msra.mxu0 0.0
      %1469 = vmatpush.msra.mxu0 %v1431
      %1470 = vmatpush.msra.mxu0 %v1429
      %1471 = vmatmul.f32.gmra.mxu0 %v449
      %v1472 = vpop.f32.mrf.mxu0
      %v1473 = vadd.f32 0.0, %v1472
      %1474 = vmatmul.f32.gmra.mxu0 %v452
      %v1475 = vpop.f32.mrf.mxu0
      %v1476 = vadd.f32 0.0, %v1475
      %1477 = vdwg.mxu0
      %1478 = vmatpush.msra.mxu0 0.0
      %1479 = vmatpush.msra.mxu0 0.0
      %1480 = vmatpush.msra.mxu0 0.0
      %1481 = vmatpush.msra.mxu0 0.0
      %1482 = vmatpush.msra.mxu0 0.0
      %1483 = vmatpush.msra.mxu0 0.0
      %1484 = vmatpush.msra.mxu0 0.0
      %1485 = vmatpush.msra.mxu0 0.0
      %1486 = vmatpush.msra.mxu0 0.0
      %1487 = vmatpush.msra.mxu0 0.0
      %1488 = vmatpush.msra.mxu0 0.0
      %1489 = vmatpush.msra.mxu0 0.0
      %1490 = vmatpush.msra.mxu0 0.0
      %1491 = vmatpush.msra.mxu0 0.0
      %1492 = vmatpush.msra.mxu0 %v1430
      %1493 = vmatpush.msra.mxu0 %v1428
      %1494 = vmatmul.f32.gmra.mxu0 %v478
      %v1495 = vpop.f32.mrf.mxu0
      %v1496 = vadd.f32 0.0, %v1495
      %1497 = vmatmul.f32.gmra.mxu0 %v481
      %v1498 = vpop.f32.mrf.mxu0
      %v1499 = vadd.f32 0.0, %v1498
      %1500 = vdwg.mxu0
      %1501 = vmatpush.msra.mxu0 0.0
      %1502 = vmatpush.msra.mxu0 0.0
      %1503 = vmatpush.msra.mxu0 0.0
      %1504 = vmatpush.msra.mxu0 0.0
      %1505 = vmatpush.msra.mxu0 0.0
      %1506 = vmatpush.msra.mxu0 0.0
      %1507 = vmatpush.msra.mxu0 0.0
      %1508 = vmatpush.msra.mxu0 0.0
      %1509 = vmatpush.msra.mxu0 0.0
      %1510 = vmatpush.msra.mxu0 0.0
      %1511 = vmatpush.msra.mxu0 0.0
      %1512 = vmatpush.msra.mxu0 0.0
      %1513 = vmatpush.msra.mxu0 0.0
      %1514 = vmatpush.msra.mxu0 0.0
      %1515 = vmatpush.msra.mxu0 %v1431
      %1516 = vmatpush.msra.mxu0 %v1429
      %1517 = vmatmul.f32.gmra.mxu0 %v478
      %v1518 = vpop.f32.mrf.mxu0
      %v1519 = vadd.f32 0.0, %v1518
      %1520 = vmatmul.f32.gmra.mxu0 %v481
      %v1521 = vpop.f32.mrf.mxu0
      %v1522 = vadd.f32 0.0, %v1521
      %1523 = vdwg.mxu0
      %v1524 = vld [vmem:[%s9] sm:$0xff]
      %v1525 = vld [vmem:[%s9 + $0x8] sm:$0xff]
      %v1526 = vld [vmem:[%s9 + $0x10] sm:$0xff]
      %v1527 = vld [vmem:[%s9 + $0x18] sm:$0xff]
      %v1528 = vld [vmem:[%s9 + $0x20] sm:$0xff]
      %v1529 = vld [vmem:[%s9 + $0x28] sm:$0xff]
      %v1530 = vld [vmem:[%s9 + $0x30] sm:$0xff]
      %v1531 = vld [vmem:[%s9 + $0x38] sm:$0xff]
      %v1532 = vld [vmem:[%s9 + $0x40] sm:$0xff]
      %v1533 = vld [vmem:[%s9 + $0x48] sm:$0xff]
      %v1534 = vld [vmem:[%s9 + $0x50] sm:$0xff]
      %v1535 = vld [vmem:[%s9 + $0x58] sm:$0xff]
      %v1536 = vld [vmem:[%s9 + $0x60] sm:$0xff]
      %v1537 = vld [vmem:[%s9 + $0x68] sm:$0xff]
      %v1538 = vld [vmem:[%s9 + $0x70] sm:$0xff]
      %v1539 = vld [vmem:[%s9 + $0x78] sm:$0xff]
      %v1540 = vld [vmem:[%s9 + $0x80] sm:$0xff]
      %v1541 = vld [vmem:[%s9 + $0x88] sm:$0xff]
      %v1542 = vld [vmem:[%s9 + $0x90] sm:$0xff]
      %v1543 = vld [vmem:[%s9 + $0x98] sm:$0xff]
      %v1544 = vld [vmem:[%s9 + $0xa0] sm:$0xff]
      %v1545 = vld [vmem:[%s9 + $0xa8] sm:$0xff]
      %v1546 = vld [vmem:[%s9 + $0xb0] sm:$0xff]
      %v1547 = vld [vmem:[%s9 + $0xb8] sm:$0xff]
      %v1548 = vld [vmem:[%s9 + $0xc0] sm:$0xff]
      %v1549 = vld [vmem:[%s9 + $0xc8] sm:$0xff]
      %v1550 = vld [vmem:[%s9 + $0xd0] sm:$0xff]
      %v1551 = vld [vmem:[%s9 + $0xd8] sm:$0xff]
      %v1552 = vld [vmem:[%s9 + $0xe0] sm:$0xff]
      %v1553 = vld [vmem:[%s9 + $0xe8] sm:$0xff]
      %v1554 = vld [vmem:[%s9 + $0xf0] sm:$0xff]
      %v1555 = vld [vmem:[%s9 + $0xf8] sm:$0xff]
      %v1556 = vld [vmem:[%s9 + $0x100] sm:$0xff]
      %v1557 = vld [vmem:[%s9 + $0x108] sm:$0xff]
      %v1558 = vld [vmem:[%s9 + $0x110] sm:$0xff]
      %v1559 = vld [vmem:[%s9 + $0x118] sm:$0xff]
      %v1560 = vld [vmem:[%s9 + $0x120] sm:$0xff]
      %v1561 = vld [vmem:[%s9 + $0x128] sm:$0xff]
      %v1562 = vld [vmem:[%s9 + $0x130] sm:$0xff]
      %v1563 = vld [vmem:[%s9 + $0x138] sm:$0xff]
      %v1564 = vld [vmem:[%s9 + $0x140] sm:$0xff]
      %v1565 = vld [vmem:[%s9 + $0x148] sm:$0xff]
      %v1566 = vld [vmem:[%s9 + $0x150] sm:$0xff]
      %v1567 = vld [vmem:[%s9 + $0x158] sm:$0xff]
      %v1568 = vld [vmem:[%s9 + $0x160] sm:$0xff]
      %v1569 = vld [vmem:[%s9 + $0x168] sm:$0xff]
      %v1570 = vld [vmem:[%s9 + $0x170] sm:$0xff]
      %v1571 = vld [vmem:[%s9 + $0x178] sm:$0xff]
      %v1572 = vld [vmem:[%s9 + $0x180] sm:$0xff]
      %v1573 = vld [vmem:[%s9 + $0x188] sm:$0xff]
      %v1574 = vld [vmem:[%s9 + $0x190] sm:$0xff]
      %v1575 = vld [vmem:[%s9 + $0x198] sm:$0xff]
      %v1576 = vld [vmem:[%s9 + $0x1a0] sm:$0xff]
      %v1577 = vld [vmem:[%s9 + $0x1a8] sm:$0xff]
      %v1578 = vld [vmem:[%s9 + $0x1b0] sm:$0xff]
      %v1579 = vld [vmem:[%s9 + $0x1b8] sm:$0xff]
      %v1580 = vld [vmem:[%s9 + $0x1c0] sm:$0xff]
      %v1581 = vld [vmem:[%s9 + $0x1c8] sm:$0xff]
      %v1582 = vld [vmem:[%s9 + $0x1d0] sm:$0xff]
      %v1583 = vld [vmem:[%s9 + $0x1d8] sm:$0xff]
      %v1584 = vld [vmem:[%s9 + $0x1e0] sm:$0xff]
      %v1585 = vld [vmem:[%s9 + $0x1e8] sm:$0xff]
      %v1586 = vld [vmem:[%s9 + $0x1f0] sm:$0xff]
      %v1587 = vld [vmem:[%s9 + $0x1f8] sm:$0xff]
      %s1588 = scalar_lea.vmem %s9, 512
      %v1589 = vld [vmem:[%s1588] sm:$0xff]
      %v1590 = vld [vmem:[%s1588 + $0x8] sm:$0xff]
      %v1591 = vld [vmem:[%s1588 + $0x10] sm:$0xff]
      %v1592 = vld [vmem:[%s1588 + $0x18] sm:$0xff]
      %v1593 = vld [vmem:[%s1588 + $0x20] sm:$0xff]
      %v1594 = vld [vmem:[%s1588 + $0x28] sm:$0xff]
      %v1595 = vld [vmem:[%s1588 + $0x30] sm:$0xff]
      %v1596 = vld [vmem:[%s1588 + $0x38] sm:$0xff]
      %v1597 = vld [vmem:[%s1588 + $0x40] sm:$0xff]
      %v1598 = vld [vmem:[%s1588 + $0x48] sm:$0xff]
      %v1599 = vld [vmem:[%s1588 + $0x50] sm:$0xff]
      %v1600 = vld [vmem:[%s1588 + $0x58] sm:$0xff]
      %v1601 = vld [vmem:[%s1588 + $0x60] sm:$0xff]
      %v1602 = vld [vmem:[%s1588 + $0x68] sm:$0xff]
      %v1603 = vld [vmem:[%s1588 + $0x70] sm:$0xff]
      %v1604 = vld [vmem:[%s1588 + $0x78] sm:$0xff]
      %v1605 = vld [vmem:[%s1588 + $0x80] sm:$0xff]
      %v1606 = vld [vmem:[%s1588 + $0x88] sm:$0xff]
      %v1607 = vld [vmem:[%s1588 + $0x90] sm:$0xff]
      %v1608 = vld [vmem:[%s1588 + $0x98] sm:$0xff]
      %v1609 = vld [vmem:[%s1588 + $0xa0] sm:$0xff]
      %v1610 = vld [vmem:[%s1588 + $0xa8] sm:$0xff]
      %v1611 = vld [vmem:[%s1588 + $0xb0] sm:$0xff]
      %v1612 = vld [vmem:[%s1588 + $0xb8] sm:$0xff]
      %v1613 = vld [vmem:[%s1588 + $0xc0] sm:$0xff]
      %v1614 = vld [vmem:[%s1588 + $0xc8] sm:$0xff]
      %v1615 = vld [vmem:[%s1588 + $0xd0] sm:$0xff]
      %v1616 = vld [vmem:[%s1588 + $0xd8] sm:$0xff]
      %v1617 = vld [vmem:[%s1588 + $0xe0] sm:$0xff]
      %v1618 = vld [vmem:[%s1588 + $0xe8] sm:$0xff]
      %v1619 = vld [vmem:[%s1588 + $0xf0] sm:$0xff]
      %v1620 = vld [vmem:[%s1588 + $0xf8] sm:$0xff]
      %v1621 = vld [vmem:[%s1588 + $0x100] sm:$0xff]
      %v1622 = vld [vmem:[%s1588 + $0x108] sm:$0xff]
      %v1623 = vld [vmem:[%s1588 + $0x110] sm:$0xff]
      %v1624 = vld [vmem:[%s1588 + $0x118] sm:$0xff]
      %v1625 = vld [vmem:[%s1588 + $0x120] sm:$0xff]
      %v1626 = vld [vmem:[%s1588 + $0x128] sm:$0xff]
      %v1627 = vld [vmem:[%s1588 + $0x130] sm:$0xff]
      %v1628 = vld [vmem:[%s1588 + $0x138] sm:$0xff]
      %v1629 = vld [vmem:[%s1588 + $0x140] sm:$0xff]
      %v1630 = vld [vmem:[%s1588 + $0x148] sm:$0xff]
      %v1631 = vld [vmem:[%s1588 + $0x150] sm:$0xff]
      %v1632 = vld [vmem:[%s1588 + $0x158] sm:$0xff]
      %v1633 = vld [vmem:[%s1588 + $0x160] sm:$0xff]
      %v1634 = vld [vmem:[%s1588 + $0x168] sm:$0xff]
      %v1635 = vld [vmem:[%s1588 + $0x170] sm:$0xff]
      %v1636 = vld [vmem:[%s1588 + $0x178] sm:$0xff]
      %v1637 = vld [vmem:[%s1588 + $0x180] sm:$0xff]
      %v1638 = vld [vmem:[%s1588 + $0x188] sm:$0xff]
      %v1639 = vld [vmem:[%s1588 + $0x190] sm:$0xff]
      %v1640 = vld [vmem:[%s1588 + $0x198] sm:$0xff]
      %v1641 = vld [vmem:[%s1588 + $0x1a0] sm:$0xff]
      %v1642 = vld [vmem:[%s1588 + $0x1a8] sm:$0xff]
      %v1643 = vld [vmem:[%s1588 + $0x1b0] sm:$0xff]
      %v1644 = vld [vmem:[%s1588 + $0x1b8] sm:$0xff]
      %v1645 = vld [vmem:[%s1588 + $0x1c0] sm:$0xff]
      %v1646 = vld [vmem:[%s1588 + $0x1c8] sm:$0xff]
      %v1647 = vld [vmem:[%s1588 + $0x1d0] sm:$0xff]
      %v1648 = vld [vmem:[%s1588 + $0x1d8] sm:$0xff]
      %v1649 = vld [vmem:[%s1588 + $0x1e0] sm:$0xff]
      %v1650 = vld [vmem:[%s1588 + $0x1e8] sm:$0xff]
      %v1651 = vld [vmem:[%s1588 + $0x1f0] sm:$0xff]
      %v1652 = vld [vmem:[%s1588 + $0x1f8] sm:$0xff]
      %1653 = vmatpush.msra.mxu0 %v1619
      %1654 = vmatpush.msra.mxu0 %v1617
      %1655 = vmatpush.msra.mxu0 %v1615
      %1656 = vmatpush.msra.mxu0 %v1613
      %1657 = vmatpush.msra.mxu0 %v1611
      %1658 = vmatpush.msra.mxu0 %v1609
      %1659 = vmatpush.msra.mxu0 %v1607
      %1660 = vmatpush.msra.mxu0 %v1605
      %1661 = vmatpush.msra.mxu0 %v1603
      %1662 = vmatpush.msra.mxu0 %v1601
      %1663 = vmatpush.msra.mxu0 %v1599
      %1664 = vmatpush.msra.mxu0 %v1597
      %1665 = vmatpush.msra.mxu0 %v1595
      %1666 = vmatpush.msra.mxu0 %v1593
      %1667 = vmatpush.msra.mxu0 %v1591
      %1668 = vmatpush.msra.mxu0 %v1589
      %1669 = vmatmul.f32.gmra.mxu0 %v1428
      %v1670 = vpop.f32.mrf.mxu0
      %v1671 = vadd.f32 0.0, %v1670
      %1672 = vmatmul.f32.gmra.mxu0 %v1430
      %v1673 = vpop.f32.mrf.mxu0
      %v1674 = vadd.f32 0.0, %v1673
      %1675 = vdwg.mxu0
      %1676 = vmatpush.msra.mxu0 %v1651
      %1677 = vmatpush.msra.mxu0 %v1649
      %1678 = vmatpush.msra.mxu0 %v1647
      %1679 = vmatpush.msra.mxu0 %v1645
      %1680 = vmatpush.msra.mxu0 %v1643
      %1681 = vmatpush.msra.mxu0 %v1641
      %1682 = vmatpush.msra.mxu0 %v1639
      %1683 = vmatpush.msra.mxu0 %v1637
      %1684 = vmatpush.msra.mxu0 %v1635
      %1685 = vmatpush.msra.mxu0 %v1633
      %1686 = vmatpush.msra.mxu0 %v1631
      %1687 = vmatpush.msra.mxu0 %v1629
      %1688 = vmatpush.msra.mxu0 %v1627
      %1689 = vmatpush.msra.mxu0 %v1625
      %1690 = vmatpush.msra.mxu0 %v1623
      %1691 = vmatpush.msra.mxu0 %v1621
      %1692 = vmatmul.f32.gmra.mxu0 %v1429
      %v1693 = vpop.f32.mrf.mxu0
      %v1694 = vadd.f32 %v1671, %v1693
      %1695 = vmatmul.f32.gmra.mxu0 %v1431
      %v1696 = vpop.f32.mrf.mxu0
      %v1697 = vadd.f32 %v1674, %v1696
      %1698 = vdwg.mxu0
      %1699 = vmatpush.msra.mxu0 %v1620
      %1700 = vmatpush.msra.mxu0 %v1618
      %1701 = vmatpush.msra.mxu0 %v1616
      %1702 = vmatpush.msra.mxu0 %v1614
      %1703 = vmatpush.msra.mxu0 %v1612
      %1704 = vmatpush.msra.mxu0 %v1610
      %1705 = vmatpush.msra.mxu0 %v1608
      %1706 = vmatpush.msra.mxu0 %v1606
      %1707 = vmatpush.msra.mxu0 %v1604
      %1708 = vmatpush.msra.mxu0 %v1602
      %1709 = vmatpush.msra.mxu0 %v1600
      %1710 = vmatpush.msra.mxu0 %v1598
      %1711 = vmatpush.msra.mxu0 %v1596
      %1712 = vmatpush.msra.mxu0 %v1594
      %1713 = vmatpush.msra.mxu0 %v1592
      %1714 = vmatpush.msra.mxu0 %v1590
      %1715 = vmatmul.f32.gmra.mxu0 %v1428
      %v1716 = vpop.f32.mrf.mxu0
      %v1717 = vadd.f32 0.0, %v1716
      %1718 = vmatmul.f32.gmra.mxu0 %v1430
      %v1719 = vpop.f32.mrf.mxu0
      %v1720 = vadd.f32 0.0, %v1719
      %1721 = vdwg.mxu0
      %1722 = vmatpush.msra.mxu0 %v1652
      %1723 = vmatpush.msra.mxu0 %v1650
      %1724 = vmatpush.msra.mxu0 %v1648
      %1725 = vmatpush.msra.mxu0 %v1646
      %1726 = vmatpush.msra.mxu0 %v1644
      %1727 = vmatpush.msra.mxu0 %v1642
      %1728 = vmatpush.msra.mxu0 %v1640
      %1729 = vmatpush.msra.mxu0 %v1638
      %1730 = vmatpush.msra.mxu0 %v1636
      %1731 = vmatpush.msra.mxu0 %v1634
      %1732 = vmatpush.msra.mxu0 %v1632
      %1733 = vmatpush.msra.mxu0 %v1630
      %1734 = vmatpush.msra.mxu0 %v1628
      %1735 = vmatpush.msra.mxu0 %v1626
      %1736 = vmatpush.msra.mxu0 %v1624
      %1737 = vmatpush.msra.mxu0 %v1622
      %1738 = vmatmul.f32.gmra.mxu0 %v1429
      %v1739 = vpop.f32.mrf.mxu0
      %v1740 = vadd.f32 %v1717, %v1739
      %1741 = vmatmul.f32.gmra.mxu0 %v1431
      %v1742 = vpop.f32.mrf.mxu0
      %v1743 = vadd.f32 %v1720, %v1742
      %1744 = vdwg.mxu0
      %1745 = vmatpush.msra.mxu0 %v1554
      %1746 = vmatpush.msra.mxu0 %v1552
      %1747 = vmatpush.msra.mxu0 %v1550
      %1748 = vmatpush.msra.mxu0 %v1548
      %1749 = vmatpush.msra.mxu0 %v1546
      %1750 = vmatpush.msra.mxu0 %v1544
      %1751 = vmatpush.msra.mxu0 %v1542
      %1752 = vmatpush.msra.mxu0 %v1540
      %1753 = vmatpush.msra.mxu0 %v1538
      %1754 = vmatpush.msra.mxu0 %v1536
      %1755 = vmatpush.msra.mxu0 %v1534
      %1756 = vmatpush.msra.mxu0 %v1532
      %1757 = vmatpush.msra.mxu0 %v1530
      %1758 = vmatpush.msra.mxu0 %v1528
      %1759 = vmatpush.msra.mxu0 %v1526
      %1760 = vmatpush.msra.mxu0 %v1524
      %1761 = vmatmul.f32.gmra.mxu0 %v1450
      %v1762 = vpop.f32.mrf.mxu0
      %v1763 = vadd.f32 %v1694, %v1762
      %1764 = vmatmul.f32.gmra.mxu0 %v1453
      %v1765 = vpop.f32.mrf.mxu0
      %v1766 = vadd.f32 %v1697, %v1765
      %1767 = vdwg.mxu0
      %1768 = vmatpush.msra.mxu0 %v1586
      %1769 = vmatpush.msra.mxu0 %v1584
      %1770 = vmatpush.msra.mxu0 %v1582
      %1771 = vmatpush.msra.mxu0 %v1580
      %1772 = vmatpush.msra.mxu0 %v1578
      %1773 = vmatpush.msra.mxu0 %v1576
      %1774 = vmatpush.msra.mxu0 %v1574
      %1775 = vmatpush.msra.mxu0 %v1572
      %1776 = vmatpush.msra.mxu0 %v1570
      %1777 = vmatpush.msra.mxu0 %v1568
      %1778 = vmatpush.msra.mxu0 %v1566
      %1779 = vmatpush.msra.mxu0 %v1564
      %1780 = vmatpush.msra.mxu0 %v1562
      %1781 = vmatpush.msra.mxu0 %v1560
      %1782 = vmatpush.msra.mxu0 %v1558
      %1783 = vmatpush.msra.mxu0 %v1556
      %1784 = vmatmul.f32.gmra.mxu0 %v1473
      %v1785 = vpop.f32.mrf.mxu0
      %v1786 = vadd.f32 %v1763, %v1785
      %1787 = vmatmul.f32.gmra.mxu0 %v1476
      %v1788 = vpop.f32.mrf.mxu0
      %v1789 = vadd.f32 %v1766, %v1788
      %1790 = vdwg.mxu0
      %1791 = vmatpush.msra.mxu0 %v1555
      %1792 = vmatpush.msra.mxu0 %v1553
      %1793 = vmatpush.msra.mxu0 %v1551
      %1794 = vmatpush.msra.mxu0 %v1549
      %1795 = vmatpush.msra.mxu0 %v1547
      %1796 = vmatpush.msra.mxu0 %v1545
      %1797 = vmatpush.msra.mxu0 %v1543
      %1798 = vmatpush.msra.mxu0 %v1541
      %1799 = vmatpush.msra.mxu0 %v1539
      %1800 = vmatpush.msra.mxu0 %v1537
      %1801 = vmatpush.msra.mxu0 %v1535
      %1802 = vmatpush.msra.mxu0 %v1533
      %1803 = vmatpush.msra.mxu0 %v1531
      %1804 = vmatpush.msra.mxu0 %v1529
      %1805 = vmatpush.msra.mxu0 %v1527
      %1806 = vmatpush.msra.mxu0 %v1525
      %1807 = vmatmul.f32.gmra.mxu0 %v1450
      %v1808 = vpop.f32.mrf.mxu0
      %v1809 = vadd.f32 %v1740, %v1808
      %1810 = vmatmul.f32.gmra.mxu0 %v1453
      %v1811 = vpop.f32.mrf.mxu0
      %v1812 = vadd.f32 %v1743, %v1811
      %1813 = vdwg.mxu0
      %1814 = vmatpush.msra.mxu0 %v1587
      %1815 = vmatpush.msra.mxu0 %v1585
      %1816 = vmatpush.msra.mxu0 %v1583
      %1817 = vmatpush.msra.mxu0 %v1581
      %1818 = vmatpush.msra.mxu0 %v1579
      %1819 = vmatpush.msra.mxu0 %v1577
      %1820 = vmatpush.msra.mxu0 %v1575
      %1821 = vmatpush.msra.mxu0 %v1573
      %1822 = vmatpush.msra.mxu0 %v1571
      %1823 = vmatpush.msra.mxu0 %v1569
      %1824 = vmatpush.msra.mxu0 %v1567
      %1825 = vmatpush.msra.mxu0 %v1565
      %1826 = vmatpush.msra.mxu0 %v1563
      %1827 = vmatpush.msra.mxu0 %v1561
      %1828 = vmatpush.msra.mxu0 %v1559
      %1829 = vmatpush.msra.mxu0 %v1557
      %1830 = vmatmul.f32.gmra.mxu0 %v1473
      %v1831 = vpop.f32.mrf.mxu0
      %v1832 = vadd.f32 %v1809, %v1831
      %1833 = vmatmul.f32.gmra.mxu0 %v1476
      %v1834 = vpop.f32.mrf.mxu0
      %v1835 = vadd.f32 %v1812, %v1834
      %1836 = vdwg.mxu0
      %s1837 = scalar_lea.vmem %s9, 1024
      %v1838 = vld [vmem:[%s1837] sm:$0xff]
      %v1839 = vld [vmem:[%s1837 + $0x8] sm:$0xff]
      %v1840 = vld [vmem:[%s1837 + $0x10] sm:$0xff]
      %v1841 = vld [vmem:[%s1837 + $0x18] sm:$0xff]
      %v1842 = vld [vmem:[%s1837 + $0x20] sm:$0xff]
      %v1843 = vld [vmem:[%s1837 + $0x28] sm:$0xff]
      %v1844 = vld [vmem:[%s1837 + $0x30] sm:$0xff]
      %v1845 = vld [vmem:[%s1837 + $0x38] sm:$0xff]
      %v1846 = vld [vmem:[%s1837 + $0x40] sm:$0xff]
      %v1847 = vld [vmem:[%s1837 + $0x48] sm:$0xff]
      %v1848 = vld [vmem:[%s1837 + $0x50] sm:$0xff]
      %v1849 = vld [vmem:[%s1837 + $0x58] sm:$0xff]
      %v1850 = vld [vmem:[%s1837 + $0x60] sm:$0xff]
      %v1851 = vld [vmem:[%s1837 + $0x68] sm:$0xff]
      %v1852 = vld [vmem:[%s1837 + $0x70] sm:$0xff]
      %v1853 = vld [vmem:[%s1837 + $0x78] sm:$0xff]
      %v1854 = vld [vmem:[%s1837 + $0x80] sm:$0xff]
      %v1855 = vld [vmem:[%s1837 + $0x88] sm:$0xff]
      %v1856 = vld [vmem:[%s1837 + $0x90] sm:$0xff]
      %v1857 = vld [vmem:[%s1837 + $0x98] sm:$0xff]
      %v1858 = vld [vmem:[%s1837 + $0xa0] sm:$0xff]
      %v1859 = vld [vmem:[%s1837 + $0xa8] sm:$0xff]
      %v1860 = vld [vmem:[%s1837 + $0xb0] sm:$0xff]
      %v1861 = vld [vmem:[%s1837 + $0xb8] sm:$0xff]
      %v1862 = vld [vmem:[%s1837 + $0xc0] sm:$0xff]
      %v1863 = vld [vmem:[%s1837 + $0xc8] sm:$0xff]
      %v1864 = vld [vmem:[%s1837 + $0xd0] sm:$0xff]
      %v1865 = vld [vmem:[%s1837 + $0xd8] sm:$0xff]
      %v1866 = vld [vmem:[%s1837 + $0xe0] sm:$0xff]
      %v1867 = vld [vmem:[%s1837 + $0xe8] sm:$0xff]
      %v1868 = vld [vmem:[%s1837 + $0xf0] sm:$0xff]
      %v1869 = vld [vmem:[%s1837 + $0xf8] sm:$0xff]
      %v1870 = vld [vmem:[%s1837 + $0x100] sm:$0xff]
      %v1871 = vld [vmem:[%s1837 + $0x108] sm:$0xff]
      %v1872 = vld [vmem:[%s1837 + $0x110] sm:$0xff]
      %v1873 = vld [vmem:[%s1837 + $0x118] sm:$0xff]
      %v1874 = vld [vmem:[%s1837 + $0x120] sm:$0xff]
      %v1875 = vld [vmem:[%s1837 + $0x128] sm:$0xff]
      %v1876 = vld [vmem:[%s1837 + $0x130] sm:$0xff]
      %v1877 = vld [vmem:[%s1837 + $0x138] sm:$0xff]
      %v1878 = vld [vmem:[%s1837 + $0x140] sm:$0xff]
      %v1879 = vld [vmem:[%s1837 + $0x148] sm:$0xff]
      %v1880 = vld [vmem:[%s1837 + $0x150] sm:$0xff]
      %v1881 = vld [vmem:[%s1837 + $0x158] sm:$0xff]
      %v1882 = vld [vmem:[%s1837 + $0x160] sm:$0xff]
      %v1883 = vld [vmem:[%s1837 + $0x168] sm:$0xff]
      %v1884 = vld [vmem:[%s1837 + $0x170] sm:$0xff]
      %v1885 = vld [vmem:[%s1837 + $0x178] sm:$0xff]
      %v1886 = vld [vmem:[%s1837 + $0x180] sm:$0xff]
      %v1887 = vld [vmem:[%s1837 + $0x188] sm:$0xff]
      %v1888 = vld [vmem:[%s1837 + $0x190] sm:$0xff]
      %v1889 = vld [vmem:[%s1837 + $0x198] sm:$0xff]
      %v1890 = vld [vmem:[%s1837 + $0x1a0] sm:$0xff]
      %v1891 = vld [vmem:[%s1837 + $0x1a8] sm:$0xff]
      %v1892 = vld [vmem:[%s1837 + $0x1b0] sm:$0xff]
      %v1893 = vld [vmem:[%s1837 + $0x1b8] sm:$0xff]
      %v1894 = vld [vmem:[%s1837 + $0x1c0] sm:$0xff]
      %v1895 = vld [vmem:[%s1837 + $0x1c8] sm:$0xff]
      %v1896 = vld [vmem:[%s1837 + $0x1d0] sm:$0xff]
      %v1897 = vld [vmem:[%s1837 + $0x1d8] sm:$0xff]
      %v1898 = vld [vmem:[%s1837 + $0x1e0] sm:$0xff]
      %v1899 = vld [vmem:[%s1837 + $0x1e8] sm:$0xff]
      %v1900 = vld [vmem:[%s1837 + $0x1f0] sm:$0xff]
      %v1901 = vld [vmem:[%s1837 + $0x1f8] sm:$0xff]
      %1902 = vmatpush.msra.mxu0 %v1868
      %1903 = vmatpush.msra.mxu0 %v1866
      %1904 = vmatpush.msra.mxu0 %v1864
      %1905 = vmatpush.msra.mxu0 %v1862
      %1906 = vmatpush.msra.mxu0 %v1860
      %1907 = vmatpush.msra.mxu0 %v1858
      %1908 = vmatpush.msra.mxu0 %v1856
      %1909 = vmatpush.msra.mxu0 %v1854
      %1910 = vmatpush.msra.mxu0 %v1852
      %1911 = vmatpush.msra.mxu0 %v1850
      %1912 = vmatpush.msra.mxu0 %v1848
      %1913 = vmatpush.msra.mxu0 %v1846
      %1914 = vmatpush.msra.mxu0 %v1844
      %1915 = vmatpush.msra.mxu0 %v1842
      %1916 = vmatpush.msra.mxu0 %v1840
      %1917 = vmatpush.msra.mxu0 %v1838
      %1918 = vmatmul.f32.gmra.mxu0 %v1496
      %v1919 = vpop.f32.mrf.mxu0
      %v1920 = vadd.f32 0.0, %v1919
      %1921 = vmatmul.f32.gmra.mxu0 %v1499
      %v1922 = vpop.f32.mrf.mxu0
      %v1923 = vadd.f32 0.0, %v1922
      %1924 = vdwg.mxu0
      %1925 = vmatpush.msra.mxu0 %v1900
      %1926 = vmatpush.msra.mxu0 %v1898
      %1927 = vmatpush.msra.mxu0 %v1896
      %1928 = vmatpush.msra.mxu0 %v1894
      %1929 = vmatpush.msra.mxu0 %v1892
      %1930 = vmatpush.msra.mxu0 %v1890
      %1931 = vmatpush.msra.mxu0 %v1888
      %1932 = vmatpush.msra.mxu0 %v1886
      %1933 = vmatpush.msra.mxu0 %v1884
      %1934 = vmatpush.msra.mxu0 %v1882
      %1935 = vmatpush.msra.mxu0 %v1880
      %1936 = vmatpush.msra.mxu0 %v1878
      %1937 = vmatpush.msra.mxu0 %v1876
      %1938 = vmatpush.msra.mxu0 %v1874
      %1939 = vmatpush.msra.mxu0 %v1872
      %1940 = vmatpush.msra.mxu0 %v1870
      %1941 = vmatmul.f32.gmra.mxu0 %v1519
      %v1942 = vpop.f32.mrf.mxu0
      %v1943 = vadd.f32 %v1920, %v1942
      %1944 = vmatmul.f32.gmra.mxu0 %v1522
      %v1945 = vpop.f32.mrf.mxu0
      %v1946 = vadd.f32 %v1923, %v1945
      %1947 = vdwg.mxu0
      %1948 = vmatpush.msra.mxu0 %v1869
      %1949 = vmatpush.msra.mxu0 %v1867
      %1950 = vmatpush.msra.mxu0 %v1865
      %1951 = vmatpush.msra.mxu0 %v1863
      %1952 = vmatpush.msra.mxu0 %v1861
      %1953 = vmatpush.msra.mxu0 %v1859
      %1954 = vmatpush.msra.mxu0 %v1857
      %1955 = vmatpush.msra.mxu0 %v1855
      %1956 = vmatpush.msra.mxu0 %v1853
      %1957 = vmatpush.msra.mxu0 %v1851
      %1958 = vmatpush.msra.mxu0 %v1849
      %1959 = vmatpush.msra.mxu0 %v1847
      %1960 = vmatpush.msra.mxu0 %v1845
      %1961 = vmatpush.msra.mxu0 %v1843
      %1962 = vmatpush.msra.mxu0 %v1841
      %1963 = vmatpush.msra.mxu0 %v1839
      %1964 = vmatmul.f32.gmra.mxu0 %v1496
      %v1965 = vpop.f32.mrf.mxu0
      %v1966 = vadd.f32 0.0, %v1965
      %1967 = vmatmul.f32.gmra.mxu0 %v1499
      %v1968 = vpop.f32.mrf.mxu0
      %v1969 = vadd.f32 0.0, %v1968
      %1970 = vdwg.mxu0
      %1971 = vmatpush.msra.mxu0 %v1901
      %1972 = vmatpush.msra.mxu0 %v1899
      %1973 = vmatpush.msra.mxu0 %v1897
      %1974 = vmatpush.msra.mxu0 %v1895
      %1975 = vmatpush.msra.mxu0 %v1893
      %1976 = vmatpush.msra.mxu0 %v1891
      %1977 = vmatpush.msra.mxu0 %v1889
      %1978 = vmatpush.msra.mxu0 %v1887
      %1979 = vmatpush.msra.mxu0 %v1885
      %1980 = vmatpush.msra.mxu0 %v1883
      %1981 = vmatpush.msra.mxu0 %v1881
      %1982 = vmatpush.msra.mxu0 %v1879
      %1983 = vmatpush.msra.mxu0 %v1877
      %1984 = vmatpush.msra.mxu0 %v1875
      %1985 = vmatpush.msra.mxu0 %v1873
      %1986 = vmatpush.msra.mxu0 %v1871
      %1987 = vmatmul.f32.gmra.mxu0 %v1519
      %v1988 = vpop.f32.mrf.mxu0
      %v1989 = vadd.f32 %v1966, %v1988
      %1990 = vmatmul.f32.gmra.mxu0 %v1522
      %v1991 = vpop.f32.mrf.mxu0
      %v1992 = vadd.f32 %v1969, %v1991
      %1993 = vdwg.mxu0
      %v1994 = vadd.f32 %v1786, %v1943
      %v1995 = vadd.f32 %v1832, %v1989
      %v1996 = vadd.f32 %v1789, %v1946
      %v1997 = vadd.f32 %v1835, %v1992
      %v1998 = vld [vmem:[%s10] sm:$0x3]
      %v2000 = vperm.slane %v1998, 0
      %v2001 = vperm.slane %v1998, 1
      %v2004 = vadd.f32 %v1994, %v2000
      %v2005 = vadd.f32 %v1995, %v2001
      %v2006 = vadd.f32 %v1996, %v2000
      %v2007 = vadd.f32 %v1997, %v2001
      %v2008 = vadd.f32 %v2004, 1.0
      %v2009 = vadd.f32 %v2006, 1.0
      %v2010 = vmul.f32 %v850, %v2008
      %v2011 = vmul.f32 %v851, %v2009
      %v2012 = vadd.f32 %v2010, %v2005
      %v2013 = vadd.f32 %v2011, %v2007
      %2014 = vmatpush.msra.mxu0 0.0
      %2015 = vmatpush.msra.mxu0 0.0
      %2016 = vmatpush.msra.mxu0 0.0
      %2017 = vmatpush.msra.mxu0 0.0
      %2018 = vmatpush.msra.mxu0 0.0
      %2019 = vmatpush.msra.mxu0 0.0
      %2020 = vmatpush.msra.mxu0 0.0
      %2021 = vmatpush.msra.mxu0 0.0
      %2022 = vmatpush.msra.mxu0 0.0
      %2023 = vmatpush.msra.mxu0 0.0
      %2024 = vmatpush.msra.mxu0 0.0
      %2025 = vmatpush.msra.mxu0 0.0
      %2026 = vmatpush.msra.mxu0 0.0
      %2027 = vmatpush.msra.mxu0 0.0
      %2028 = vmatpush.msra.mxu0 %v2013
      %2029 = vmatpush.msra.mxu0 %v2012
      %2030 = vmatmul.f32.gmra.mxu0 %v449
      %v2031 = vpop.f32.mrf.mxu0
      %v2032 = vadd.f32 0.0, %v2031
      %2033 = vmatmul.f32.gmra.mxu0 %v452
      %v2034 = vpop.f32.mrf.mxu0
      %v2035 = vadd.f32 0.0, %v2034
      %2036 = vdwg.mxu0
      %2037 = vmatpush.msra.mxu0 0.0
      %2038 = vmatpush.msra.mxu0 0.0
      %2039 = vmatpush.msra.mxu0 0.0
      %2040 = vmatpush.msra.mxu0 0.0
      %2041 = vmatpush.msra.mxu0 0.0
      %2042 = vmatpush.msra.mxu0 0.0
      %2043 = vmatpush.msra.mxu0 0.0
      %2044 = vmatpush.msra.mxu0 0.0
      %2045 = vmatpush.msra.mxu0 0.0
      %2046 = vmatpush.msra.mxu0 0.0
      %2047 = vmatpush.msra.mxu0 0.0
      %2048 = vmatpush.msra.mxu0 0.0
      %2049 = vmatpush.msra.mxu0 0.0
      %2050 = vmatpush.msra.mxu0 0.0
      %2051 = vmatpush.msra.mxu0 %v2013
      %2052 = vmatpush.msra.mxu0 %v2012
      %2053 = vmatmul.f32.gmra.mxu0 %v478
      %v2054 = vpop.f32.mrf.mxu0
      %v2055 = vadd.f32 0.0, %v2054
      %2056 = vmatmul.f32.gmra.mxu0 %v481
      %v2057 = vpop.f32.mrf.mxu0
      %v2058 = vadd.f32 0.0, %v2057
      %2059 = vdwg.mxu0
      %v2060 = vld [vmem:[%s11] sm:$0xff]
      %v2061 = vld [vmem:[%s11 + $0x8] sm:$0xff]
      %v2062 = vld [vmem:[%s11 + $0x10] sm:$0xff]
      %v2063 = vld [vmem:[%s11 + $0x18] sm:$0xff]
      %v2064 = vld [vmem:[%s11 + $0x20] sm:$0xff]
      %v2065 = vld [vmem:[%s11 + $0x28] sm:$0xff]
      %v2066 = vld [vmem:[%s11 + $0x30] sm:$0xff]
      %v2067 = vld [vmem:[%s11 + $0x38] sm:$0xff]
      %v2068 = vld [vmem:[%s11 + $0x40] sm:$0xff]
      %v2069 = vld [vmem:[%s11 + $0x48] sm:$0xff]
      %v2070 = vld [vmem:[%s11 + $0x50] sm:$0xff]
      %v2071 = vld [vmem:[%s11 + $0x58] sm:$0xff]
      %v2072 = vld [vmem:[%s11 + $0x60] sm:$0xff]
      %v2073 = vld [vmem:[%s11 + $0x68] sm:$0xff]
      %v2074 = vld [vmem:[%s11 + $0x70] sm:$0xff]
      %v2075 = vld [vmem:[%s11 + $0x78] sm:$0xff]
      %s2076 = scalar_lea.vmem %s11, 128
      %v2077 = vld [vmem:[%s2076] sm:$0xff]
      %v2078 = vld [vmem:[%s2076 + $0x8] sm:$0xff]
      %v2079 = vld [vmem:[%s2076 + $0x10] sm:$0xff]
      %v2080 = vld [vmem:[%s2076 + $0x18] sm:$0xff]
      %v2081 = vld [vmem:[%s2076 + $0x20] sm:$0xff]
      %v2082 = vld [vmem:[%s2076 + $0x28] sm:$0xff]
      %v2083 = vld [vmem:[%s2076 + $0x30] sm:$0xff]
      %v2084 = vld [vmem:[%s2076 + $0x38] sm:$0xff]
      %v2085 = vld [vmem:[%s2076 + $0x40] sm:$0xff]
      %v2086 = vld [vmem:[%s2076 + $0x48] sm:$0xff]
      %v2087 = vld [vmem:[%s2076 + $0x50] sm:$0xff]
      %v2088 = vld [vmem:[%s2076 + $0x58] sm:$0xff]
      %v2089 = vld [vmem:[%s2076 + $0x60] sm:$0xff]
      %v2090 = vld [vmem:[%s2076 + $0x68] sm:$0xff]
      %v2091 = vld [vmem:[%s2076 + $0x70] sm:$0xff]
      %v2092 = vld [vmem:[%s2076 + $0x78] sm:$0xff]
      %2093 = vmatpush.msra.mxu0 %v2092
      %2094 = vmatpush.msra.mxu0 %v2091
      %2095 = vmatpush.msra.mxu0 %v2090
      %2096 = vmatpush.msra.mxu0 %v2089
      %2097 = vmatpush.msra.mxu0 %v2088
      %2098 = vmatpush.msra.mxu0 %v2087
      %2099 = vmatpush.msra.mxu0 %v2086
      %2100 = vmatpush.msra.mxu0 %v2085
      %2101 = vmatpush.msra.mxu0 %v2084
      %2102 = vmatpush.msra.mxu0 %v2083
      %2103 = vmatpush.msra.mxu0 %v2082
      %2104 = vmatpush.msra.mxu0 %v2081
      %2105 = vmatpush.msra.mxu0 %v2080
      %2106 = vmatpush.msra.mxu0 %v2079
      %2107 = vmatpush.msra.mxu0 %v2078
      %2108 = vmatpush.msra.mxu0 %v2077
      %2109 = vmatmul.f32.gmra.mxu0 %v2012
      %v2110 = vpop.f32.mrf.mxu0
      %v2111 = vadd.f32 0.0, %v2110
      %2112 = vmatmul.f32.gmra.mxu0 %v2013
      %v2113 = vpop.f32.mrf.mxu0
      %v2114 = vadd.f32 0.0, %v2113
      %2115 = vdwg.mxu0
      %2116 = vmatpush.msra.mxu0 %v2075
      %2117 = vmatpush.msra.mxu0 %v2074
      %2118 = vmatpush.msra.mxu0 %v2073
      %2119 = vmatpush.msra.mxu0 %v2072
      %2120 = vmatpush.msra.mxu0 %v2071
      %2121 = vmatpush.msra.mxu0 %v2070
      %2122 = vmatpush.msra.mxu0 %v2069
      %2123 = vmatpush.msra.mxu0 %v2068
      %2124 = vmatpush.msra.mxu0 %v2067
      %2125 = vmatpush.msra.mxu0 %v2066
      %2126 = vmatpush.msra.mxu0 %v2065
      %2127 = vmatpush.msra.mxu0 %v2064
      %2128 = vmatpush.msra.mxu0 %v2063
      %2129 = vmatpush.msra.mxu0 %v2062
      %2130 = vmatpush.msra.mxu0 %v2061
      %2131 = vmatpush.msra.mxu0 %v2060
      %2132 = vmatmul.f32.gmra.mxu0 %v2032
      %v2133 = vpop.f32.mrf.mxu0
      %v2134 = vadd.f32 %v2111, %v2133
      %2135 = vmatmul.f32.gmra.mxu0 %v2035
      %v2136 = vpop.f32.mrf.mxu0
      %v2137 = vadd.f32 %v2114, %v2136
      %2138 = vdwg.mxu0
      %s2139 = scalar_lea.vmem %s11, 256
      %v2140 = vld [vmem:[%s2139] sm:$0xff]
      %v2141 = vld [vmem:[%s2139 + $0x8] sm:$0xff]
      %v2142 = vld [vmem:[%s2139 + $0x10] sm:$0xff]
      %v2143 = vld [vmem:[%s2139 + $0x18] sm:$0xff]
      %v2144 = vld [vmem:[%s2139 + $0x20] sm:$0xff]
      %v2145 = vld [vmem:[%s2139 + $0x28] sm:$0xff]
      %v2146 = vld [vmem:[%s2139 + $0x30] sm:$0xff]
      %v2147 = vld [vmem:[%s2139 + $0x38] sm:$0xff]
      %v2148 = vld [vmem:[%s2139 + $0x40] sm:$0xff]
      %v2149 = vld [vmem:[%s2139 + $0x48] sm:$0xff]
      %v2150 = vld [vmem:[%s2139 + $0x50] sm:$0xff]
      %v2151 = vld [vmem:[%s2139 + $0x58] sm:$0xff]
      %v2152 = vld [vmem:[%s2139 + $0x60] sm:$0xff]
      %v2153 = vld [vmem:[%s2139 + $0x68] sm:$0xff]
      %v2154 = vld [vmem:[%s2139 + $0x70] sm:$0xff]
      %v2155 = vld [vmem:[%s2139 + $0x78] sm:$0xff]
      %2156 = vmatpush.msra.mxu0 %v2155
      %2157 = vmatpush.msra.mxu0 %v2154
      %2158 = vmatpush.msra.mxu0 %v2153
      %2159 = vmatpush.msra.mxu0 %v2152
      %2160 = vmatpush.msra.mxu0 %v2151
      %2161 = vmatpush.msra.mxu0 %v2150
      %2162 = vmatpush.msra.mxu0 %v2149
      %2163 = vmatpush.msra.mxu0 %v2148
      %2164 = vmatpush.msra.mxu0 %v2147
      %2165 = vmatpush.msra.mxu0 %v2146
      %2166 = vmatpush.msra.mxu0 %v2145
      %2167 = vmatpush.msra.mxu0 %v2144
      %2168 = vmatpush.msra.mxu0 %v2143
      %2169 = vmatpush.msra.mxu0 %v2142
      %2170 = vmatpush.msra.mxu0 %v2141
      %2171 = vmatpush.msra.mxu0 %v2140
      %2172 = vmatmul.f32.gmra.mxu0 %v2055
      %v2173 = vpop.f32.mrf.mxu0
      %v2174 = vadd.f32 0.0, %v2173
      %2175 = vmatmul.f32.gmra.mxu0 %v2058
      %v2176 = vpop.f32.mrf.mxu0
      %v2177 = vadd.f32 0.0, %v2176
      %2178 = vdwg.mxu0
      %v2179 = vadd.f32 %v2134, %v2174
      %v2180 = vadd.f32 %v2137, %v2177
      %v2181 = vld [vmem:[%s12] sm:$0x1]
      %v2183 = vperm.slane %v2181, 0
      %v2185 = vadd.f32 %v2179, %v2183
      %v2186 = vadd.f32 %v2180, %v2183
      %2187 = vst [vmem:[%s440] sm:$0xff] %v2185
      %2188 = vst [vmem:[%s440 + $0x8] sm:$0xff] %v2186
      %p2189 = scmp.lt.s32.totalorder %s24, 1
      %s2190 = scalar_select %p2189, %s24, 1
      %s2191 = smul.addr %s2190, 2
      %s2192 = smul.addr %s2191, 8
      %s2193 = scalar_lea.vmem %s13, %s2192
      // Predicated region
      $region73: #{spade_forward.1} parent=71 // pred_check
        %p2194 = pneg %p320
      $region74: #{spade_forward.1} parent=71 // pred_check_branch
        %2196 = sbr.rel (%p2194) target = $region76
      $region75: #{spade_forward.1} parent=71 // pred_region
        _
      $region76: #{spade_forward.1} parent=71 // pred_fallthru
        _
    $region72: #{spade_forward.1} parent=5 // pred_fallthru
      _
    %p2197 = scmp.le.s32.totalorder 2, %s19
    // Predicated region
    $region77: #{spade_forward.1} parent=5 // pred_check
      %p2198 = pneg %p2197
    $region78: #{spade_forward.1} parent=5 // pred_check_branch
      %2200 = sbr.rel (%p2198) target = $region80
    $region79: #{spade_forward.1} parent=5 // pred_region
      %s2201 = ssub.s32 %s19, 2
      // Predicated region
      $region81: #{spade_forward.1} parent=79 // pred_check
        %p2202 = pneg %p326
      $region82: #{spade_forward.1} parent=79 // pred_check_branch
        %2204 = sbr.rel (%p2202) target = $region84
      $region83: #{spade_forward.1} parent=79 // pred_region
        %p2205 = scmp.lt.s32.totalorder %s25, 1
        %s2206 = scalar_select %p2205, %s25, 1
        %s2207 = smul.addr %s2206, 2
        %s2208 = smul.addr %s2207, 8
        %s2209 = scalar_lea.vmem %s13, %s2208
      $region84: #{spade_forward.1} parent=79 // pred_fallthru
        _
    $region80: #{spade_forward.1} parent=5 // pred_fallthru
      _
  $region6: #{spade_forward.1} parent=0 // loop_footer
    %s23 = sadd.s32 1, %s19
  $region7: #{spade_forward.1} parent=0 // loop_footer_branch
    %18 = sbr.rel target = $region3
  $region8: #{spade_forward.1} parent=0 // loop_exit
    _

</llo_original>
